<compile_context>
chip_gen: v6e
topology: v6e:2x2x1
jax: 0.10.0
libtpu: 0.0.40
codegen_flags: <defaults>
</compile_context>

<pallas_src>
import functools

import jax
import jax.numpy as jnp
import numpy as np
from jax.experimental import pallas as pl
from jax.experimental.pallas import tpu as pltpu

_SUBLANE = 8
_LANE = 128


def _round_up(x: int, m: int) -> int:
    return (x + m - 1) // m * m


def _attn_kernel(gru_ref, lens_ref, wt_ref, b_ref, u_ref, weighted_ref, alpha_ref):
    """One grid step == TB batch elements.

    gru_ref      : VMEM (TB, T, H)   f32/bf16  GRU outputs for this block (T padded to 8)
    lens_ref     : VMEM (TB, 1)      i32       sequence lengths
    wt_ref       : VMEM (H, H)       f32/bf16  attention_transform.weight, PRE-TRANSPOSED
    b_ref        : VMEM (1, H)       f32       attention_transform.bias
    u_ref        : VMEM (1, H)       f32       context_vector.weight
    weighted_ref : VMEM (TB, H)      f32
    alpha_ref    : VMEM (TB, T_out)  f32       T_out = T padded to a multiple of 128
    """
    TB, T, H = gru_ref.shape
    T_out = alpha_ref.shape[1]
    x = gru_ref[...]

    # uit = tanh(x @ W^T + b). W^T was hoisted to the wrapper; T % 8 == 0 so the reshapes
    # are layout no-ops and this is a single (TB*T, H) x (H, H) MXU matmul.
    x2 = x.reshape(TB * T, H)
    if x2.dtype == jnp.float32:
        acc = jnp.dot(x2, wt_ref[...], precision=jax.lax.Precision.HIGHEST,
                      preferred_element_type=jnp.float32)
    else:  # bf16 operands, f32 accumulation
        acc = jnp.dot(x2, wt_ref[...], preferred_element_type=jnp.float32)
    uit = jnp.tanh(acc + b_ref[...]).reshape(TB, T, H)

    # scores = <uit, u> along H, kept in the same sublane-T layout as x: (TB, T, 1).
    scores = jnp.sum(uit * u_ref[...], axis=-1, keepdims=True)

    # Mask t >= length with a large finite negative (no NaN for length == 0 rows).
    t_ids = jax.lax.broadcasted_iota(jnp.int32, (TB, T, 1), 1)
    lens = lens_ref[...].reshape(TB, 1, 1)
    scores = jnp.where(t_ids >= lens, jnp.float32(-1e30), scores)

    # Softmax over the sequence axis (f32 throughout), still (TB, T, 1).
    m = jnp.max(scores, axis=1, keepdims=True)
    e = jnp.exp(scores - m)
    alpha = e / jnp.sum(e, axis=1, keepdims=True)

    # weighted = sum_t alpha_t * x_t — alpha broadcasts along lanes, no relayout needed.
    weighted_ref[...] = jnp.sum(x * alpha, axis=1).astype(weighted_ref.dtype)

    # Single lane-dense alpha store (zero-pad to T_out lanes -> unmasked vst).
    alpha2d = alpha[:, :, 0]                                        # (TB, T)
    if T_out > T:
        alpha2d = jnp.concatenate(
            [alpha2d, jnp.zeros((TB, T_out - T), jnp.float32)], axis=1)
    alpha_ref[...] = alpha2d


def _pick_block_b(batch: int, t_pad: int, h: int, itemsize: int,
                  per_block_bytes: int = 4 << 20) -> int:
    """Largest multiple-of-8 batch block whose gru tile fits `per_block_bytes` (cap 512 rows),
    never padding the batch beyond the next multiple of 8, and keeping >= 2 grid steps
    whenever batch > 8 (v7x has 2 TensorCores on the "parallel" batch axis)."""
    tb = (per_block_bytes // max(1, t_pad * h * itemsize)) // _SUBLANE * _SUBLANE
    tb = max(_SUBLANE, min(tb, 512))
    tb = min(tb, _round_up(batch, _SUBLANE))
    if batch > _SUBLANE:
        tb = min(tb, _round_up((batch + 1) // 2, _SUBLANE))
    return tb


@functools.partial(jax.jit, static_argnames=("use_bf16",))
def attention_pallas(gru_output, lengths, wt, b, u, use_bf16: bool = False):
    """gru_output: (B, T, H) f32, lengths: (B,) int, wt: (H, H) = W^T (PRE-transposed),
    b: (H,), u: (H,). Returns (weighted (B, H), alpha (B, T)), matching Attention.forward."""
    B, T, H = gru_output.shape
    in_dtype = jnp.bfloat16 if use_bf16 else jnp.float32
    itemsize = jnp.dtype(in_dtype).itemsize

    # Sublane-pad T (no-op in-kernel reshapes); lane-pad the alpha output width.
    T_pad = _round_up(T, _SUBLANE)
    T_out = _round_up(T_pad, _LANE)

    tb = _pick_block_b(B, T_pad, H, itemsize)
    B_pad = _round_up(B, tb)
    grid = (B_pad // tb,)

    x = gru_output.astype(in_dtype)
    if T_pad != T or B_pad != B:
        x = jnp.pad(x, ((0, B_pad - B), (0, T_pad - T), (0, 0)))
    lens2 = jnp.pad(lengths.astype(jnp.int32), (0, B_pad - B)).reshape(B_pad, 1)

    wt_c = wt.astype(in_dtype)
    b2 = b.astype(jnp.float32).reshape(1, H)
    u2 = u.astype(jnp.float32).reshape(1, H)

    grid_spec = pltpu.PrefetchScalarGridSpec(
        num_scalar_prefetch=0,
        grid=grid,
        in_specs=[
            pl.BlockSpec((tb, T_pad, H), lambda i: (i, 0, 0)),   # gru block
            pl.BlockSpec((tb, 1),        lambda i: (i, 0)),      # lengths block
            pl.BlockSpec((H, H),         lambda i: (0, 0)),      # W^T (resident every step)
            pl.BlockSpec((1, H),         lambda i: (0, 0)),      # bias
            pl.BlockSpec((1, H),         lambda i: (0, 0)),      # context vector
        ],
        out_specs=[
            pl.BlockSpec((tb, H),     lambda i: (i, 0)),         # weighted
            pl.BlockSpec((tb, T_out), lambda i: (i, 0)),         # alpha (lane-dense)
        ],
    )

    cost = pl.CostEstimate(
        flops=2 * B_pad * T_pad * H * H + 6 * B_pad * T_pad * H,
        transcendentals=B_pad * T_pad * H + B_pad * T_pad,
        bytes_accessed=(itemsize * (B_pad * T_pad * H + H * H)
                        + 4 * (2 * H + B_pad + B_pad * H + B_pad * T_out)),
    )

    weighted, alpha = pl.pallas_call(
        _attn_kernel,
        grid_spec=grid_spec,
        out_shape=(
            jax.ShapeDtypeStruct((B_pad, H), jnp.float32),
            jax.ShapeDtypeStruct((B_pad, T_out), jnp.float32),
        ),
        compiler_params=pltpu.CompilerParams(
            dimension_semantics=("parallel",),
            vmem_limit_bytes=48 * 1024 * 1024,
        ),
        cost_estimate=cost,
    )(x, lens2, wt_c, b2, u2)

    return weighted[:B], alpha[:B, :T]


def attention_ref(gru_output, lengths, w, b, u):
    """Pure-JAX reference mirroring the PyTorch forward."""
    uit = jnp.tanh(jnp.einsum("bth,oh->bto", gru_output, w) + b)   # (B, T, H)
    scores = jnp.einsum("bth,h->bt", uit, u)                        # (B, T)
    T = scores.shape[1]
    mask = jnp.arange(T)[None, :] >= lengths[:, None]
    scores = jnp.where(mask, -jnp.inf, scores)
    alpha = jax.nn.softmax(scores, axis=1)
    weighted = jnp.sum(gru_output * alpha[:, :, None], axis=1)
    return weighted, alpha


def _run_case(key, B, T, H, use_bf16=False, rtol=1e-5, atol=1e-5):
    k_x, k_w, k_b, k_u, k_l = jax.random.split(key, 5)
    gru_output = jax.random.normal(k_x, (B, T, H), dtype=jnp.float32)
    lengths = jax.random.randint(k_l, (B,), 1, T + 1, dtype=jnp.int32)

    # Parameters with nn.Linear(H, H) / nn.Linear(H, 1, bias=False) shapes.
    w = jax.random.normal(k_w, (H, H), dtype=jnp.float32) * (1.0 / np.sqrt(H))
    b = jax.random.normal(k_b, (H,), dtype=jnp.float32) * 0.1
    u = jax.random.normal(k_u, (H,), dtype=jnp.float32) * (1.0 / np.sqrt(H))

    wt = w.T  # pre-transpose ONCE, outside the jitted call

    weighted, alpha = attention_pallas(gru_output, lengths, wt, b, u, use_bf16=use_bf16)
    jax.block_until_ready((weighted, alpha))

    weighted_r, alpha_r = attention_ref(gru_output, lengths, w, b, u)
    np.testing.assert_allclose(np.asarray(weighted), np.asarray(weighted_r), rtol=rtol, atol=atol)
    np.testing.assert_allclose(np.asarray(alpha), np.asarray(alpha_r), rtol=rtol, atol=atol)


if __name__ == "__main__":
    key = jax.random.PRNGKey(0)
    k1, k2, k3 = jax.random.split(key, 3)

    # Batched-grid path: B=16 -> TB=8, grid=(2,) (both v7x TensorCores get work).
    _run_case(k1, B=16, T=8, H=32)

    # Ragged shapes: B and T not multiples of 8 -> wrapper pads B->8, T->16, alpha lanes->128.
    _run_case(k2, B=5, T=10, H=32)

    # Opt-in bf16 operand path (halves HBM traffic / fast MXU path; looser tolerance).
    _run_case(k3, B=16, T=8, H=32, use_bf16=True, rtol=3e-2, atol=3e-2)

    print("KERNEL_OK")
</pallas_src>

<mosaic_0001>
module attributes {stable_mosaic.version = 11 : i64} {
  func.func @_attn_kernel(%arg0: i32, %arg1: memref<8x8x32xf32, #tpu.memory_space<vmem>>, %arg2: memref<8x1xi32, #tpu.memory_space<vmem>>, %arg3: memref<32x32xf32, #tpu.memory_space<vmem>>, %arg4: memref<1x32xf32, #tpu.memory_space<vmem>>, %arg5: memref<1x32xf32, #tpu.memory_space<vmem>>, %arg6: memref<8x32xf32, #tpu.memory_space<vmem>>, %arg7: memref<8x128xf32, #tpu.memory_space<vmem>>) attributes {dimension_semantics = [#tpu.dimension_semantics<parallel>], iteration_bounds = array<i64: 2>, scalar_prefetch = 0 : i64, scratch_operands = 0 : i64, tpu.core_type = #tpu.core_type<tc>, window_params = [{transform_indices = @transform_0, window_bounds = array<i64: 8, 8, 32>}, {transform_indices = @transform_1, window_bounds = array<i64: 8, 1>}, {pipeline_mode = #tpu.pipeline_mode<synchronous>, transform_indices = @transform_2, window_bounds = array<i64: 32, 32>}, {pipeline_mode = #tpu.pipeline_mode<synchronous>, transform_indices = @transform_3, window_bounds = array<i64: 1, 32>}, {pipeline_mode = #tpu.pipeline_mode<synchronous>, transform_indices = @transform_4, window_bounds = array<i64: 1, 32>}, {transform_indices = @transform_5, window_bounds = array<i64: 8, 32>}, {transform_indices = @transform_6, window_bounds = array<i64: 8, 128>}]} {
    %c0 = arith.constant 0 : index
    %c0_0 = arith.constant 0 : index
    %c0_1 = arith.constant 0 : index
    %0 = vector.load %arg1[%c0, %c0_0, %c0_1] : memref<8x8x32xf32, #tpu.memory_space<vmem>>, vector<8x8x32xf32>
    %1 = vector.shape_cast %0 : vector<8x8x32xf32> to vector<64x32xf32>
    %c0_2 = arith.constant 0 : index
    %c0_3 = arith.constant 0 : index
    %2 = vector.load %arg3[%c0_2, %c0_3] : memref<32x32xf32, #tpu.memory_space<vmem>>, vector<32x32xf32>
    %cst = arith.constant dense<0.000000e+00> : vector<64x32xf32>
    %3 = tpu.matmul %1, %2, %cst {dimension_numbers = #tpu.dot_dimension_numbers<[1], [0], [0], [1], [0, 0, 1, 1], [], []>, precision = #tpu.contract_precision<fp32>} : vector<64x32xf32>, vector<32x32xf32>, vector<64x32xf32> -> vector<64x32xf32>
    %c0_4 = arith.constant 0 : index
    %c0_5 = arith.constant 0 : index
    %4 = vector.load %arg4[%c0_4, %c0_5] : memref<1x32xf32, #tpu.memory_space<vmem>>, vector<1x32xf32>
    %5 = vector.broadcast %4 : vector<1x32xf32> to vector<64x32xf32>
    %6 = arith.addf %3, %5 : vector<64x32xf32>
    %7 = math.tanh %6 : vector<64x32xf32>
    %8 = vector.shape_cast %7 : vector<64x32xf32> to vector<8x8x32xf32>
    %c0_6 = arith.constant 0 : index
    %c0_7 = arith.constant 0 : index
    %9 = vector.load %arg5[%c0_6, %c0_7] : memref<1x32xf32, #tpu.memory_space<vmem>>, vector<1x32xf32>
    %10 = vector.shape_cast %9 : vector<1x32xf32> to vector<1x1x32xf32>
    %11 = vector.broadcast %10 : vector<1x1x32xf32> to vector<8x8x32xf32>
    %12 = arith.mulf %8, %11 : vector<8x8x32xf32>
    %cst_8 = arith.constant dense<0.000000e+00> : vector<8x8xf32>
    %13 = vector.multi_reduction <add>, %12, %cst_8 [2] : vector<8x8x32xf32> to vector<8x8xf32>
    %14 = vector.shape_cast %13 : vector<8x8xf32> to vector<8x8x1xf32>
    %15 = tpu.iota {dimensions = array<i32: 1>} : vector<8x8x1xi32>
    %c0_9 = arith.constant 0 : index
    %c0_10 = arith.constant 0 : index
    %16 = vector.load %arg2[%c0_9, %c0_10] : memref<8x1xi32, #tpu.memory_space<vmem>>, vector<8x1xi32>
    %17 = vector.shape_cast %16 : vector<8x1xi32> to vector<8x1x1xi32>
    %18 = vector.broadcast %17 : vector<8x1x1xi32> to vector<8x8x1xi32>
    %19 = arith.cmpi sge, %15, %18 : vector<8x8x1xi32>
    %cst_11 = arith.constant -1.000000e+30 : f32
    %20 = vector.broadcast %cst_11 : f32 to vector<8x8x1xf32>
    %21 = arith.select %19, %20, %14 : vector<8x8x1xi1>, vector<8x8x1xf32>
    %cst_12 = arith.constant dense<0xFF800000> : vector<8x1xf32>
    %22 = vector.multi_reduction <maximumf>, %21, %cst_12 [1] : vector<8x8x1xf32> to vector<8x1xf32>
    %23 = vector.shape_cast %22 : vector<8x1xf32> to vector<8x1x1xf32>
    %24 = vector.broadcast %23 : vector<8x1x1xf32> to vector<8x8x1xf32>
    %25 = arith.subf %21, %24 : vector<8x8x1xf32>
    %26 = math.exp %25 : vector<8x8x1xf32>
    %cst_13 = arith.constant dense<0.000000e+00> : vector<8x1xf32>
    %27 = vector.multi_reduction <add>, %26, %cst_13 [1] : vector<8x8x1xf32> to vector<8x1xf32>
    %28 = vector.shape_cast %27 : vector<8x1xf32> to vector<8x1x1xf32>
    %29 = vector.broadcast %28 : vector<8x1x1xf32> to vector<8x8x1xf32>
    %30 = arith.divf %26, %29 : vector<8x8x1xf32>
    %31 = vector.broadcast %30 : vector<8x8x1xf32> to vector<8x8x32xf32>
    %32 = arith.mulf %0, %31 : vector<8x8x32xf32>
    %cst_14 = arith.constant dense<0.000000e+00> : vector<8x32xf32>
    %33 = vector.multi_reduction <add>, %32, %cst_14 [1] : vector<8x8x32xf32> to vector<8x32xf32>
    %c0_15 = arith.constant 0 : index
    %c0_16 = arith.constant 0 : index
    %34 = vector.load %arg6[%c0_15, %c0_16] : memref<8x32xf32, #tpu.memory_space<vmem>>, vector<8x32xf32>
    tpu.vector_store %arg6[%c0_15, %c0_16], %33 {strides = array<i32>} : memref<8x32xf32, #tpu.memory_space<vmem>>, vector<8x32xf32>,
    %35 = vector.shape_cast %30 : vector<8x8x1xf32> to vector<8x8xf32>
    %cst_17 = arith.constant 0.000000e+00 : f32
    %36 = vector.broadcast %cst_17 : f32 to vector<8x120xf32>
    %37 = tpu.concatenate %35, %36 in 1 : vector<8x8xf32>, vector<8x120xf32> -> vector<8x128xf32>
    %c0_18 = arith.constant 0 : index
    %c0_19 = arith.constant 0 : index
    %38 = vector.load %arg7[%c0_18, %c0_19] : memref<8x128xf32, #tpu.memory_space<vmem>>, vector<8x128xf32>
    tpu.vector_store %arg7[%c0_18, %c0_19], %37 {strides = array<i32>} : memref<8x128xf32, #tpu.memory_space<vmem>>, vector<8x128xf32>,
    return
  }
  func.func @transform_0(%arg0: i32) -> (i32, i32, i32) {
    %c0_i32 = arith.constant 0 : i32
    %c0_i32_0 = arith.constant 0 : i32
    %c0_i32_1 = arith.constant 0 : i32
    return %arg0, %c0_i32, %c0_i32_0 : i32, i32, i32
  }
  func.func @transform_1(%arg0: i32) -> (i32, i32) {
    %c0_i32 = arith.constant 0 : i32
    %c0_i32_0 = arith.constant 0 : i32
    return %arg0, %c0_i32 : i32, i32
  }
  func.func @transform_2(%arg0: i32) -> (i32, i32) {
    %c0_i32 = arith.constant 0 : i32
    %c0_i32_0 = arith.constant 0 : i32
    %c0_i32_1 = arith.constant 0 : i32
    return %c0_i32, %c0_i32_0 : i32, i32
  }
  func.func @transform_3(%arg0: i32) -> (i32, i32) {
    %c0_i32 = arith.constant 0 : i32
    %c0_i32_0 = arith.constant 0 : i32
    %c0_i32_1 = arith.constant 0 : i32
    return %c0_i32, %c0_i32_0 : i32, i32
  }
  func.func @transform_4(%arg0: i32) -> (i32, i32) {
    %c0_i32 = arith.constant 0 : i32
    %c0_i32_0 = arith.constant 0 : i32
    %c0_i32_1 = arith.constant 0 : i32
    return %c0_i32, %c0_i32_0 : i32, i32
  }
  func.func @transform_5(%arg0: i32) -> (i32, i32) {
    %c0_i32 = arith.constant 0 : i32
    %c0_i32_0 = arith.constant 0 : i32
    return %arg0, %c0_i32 : i32, i32
  }
  func.func @transform_6(%arg0: i32) -> (i32, i32) {
    %c0_i32 = arith.constant 0 : i32
    %c0_i32_0 = arith.constant 0 : i32
    return %arg0, %c0_i32 : i32, i32
  }
}

</mosaic_0001>

<llo_original>
// kernel: attention_pallas.1
$region0: #{attention_pallas.1}
  #allocation0 [shape = 'u32[]', space=smem, size = 0x4, offset = 0x4, fixed_abs, tag = 'smem constant byte address 0x4 - core index']
  #allocation1 [shape = 'u32[144,128]{1,0:T(1,128)}', space=vmem, size = 0x12000, scoped, tag = 'internal scratch']
  %s0 = inlined_call_operand.hbm [shape: f32[16,8,32], index: 0, kind: input, shape index: {}]
  %s1 = inlined_call_operand.vmem [shape: s32[16,1], index: 1, kind: input, shape index: {}]
  %s2 = inlined_call_operand.hbm [shape: f32[32,32], index: 2, kind: input, shape index: {}]
  %s3 = inlined_call_operand.vmem [shape: f32[1,32], index: 3, kind: input, shape index: {}]
  %s4 = inlined_call_operand.vmem [shape: f32[1,32], index: 4, kind: input, shape index: {}]
  %s5 = inlined_call_operand.hbm [shape: f32[16,32], index: 5, kind: output, shape index: {0}]
  %s6 = inlined_call_operand.vmem [shape: f32[16,128], index: 6, kind: output, shape index: {1}]
  %7 = xla_tuple %s5, %s6
  %s8 = sld [smem:[#allocation0]]
  $region69: #{attention_pallas.1} parent=0
    _
  %s10 = ssub.s32 1, %s8
  %s11 = scalar_select 0, %s10, %s8
  $region1: #{attention_pallas.1} parent=0
    #allocation2 [shape = 'u8[65536]{0}', space=vmem, size = 0x10000, scoped, tag = 'input window, operand 0']
    #allocation3 [shape = 's32[2]{0}', space=sflag, size = 0x8, scoped, tag = 'scoped memory for attention_pallas.1']
    #allocation4 [shape = 's32[2]{0}', space=sflag, size = 0x8, scoped, tag = 'scoped memory for attention_pallas.1']
    #allocation5 [shape = 'u8[16384]{0}', space=vmem, size = 0x4000, scoped, tag = 'input window, operand 2, single buffered']
    #allocation6 [shape = 's32[1]{0}', space=sflag, size = 0x4, scoped, tag = 'scoped memory for attention_pallas.1']
    #allocation7 [shape = 'u8[8192]{0}', space=vmem, size = 0x2000, scoped, tag = 'output window, operand 0']
    %12 = vsyncpa [#allocation3], 0
    %s13 = scalar_lea.sflag [#allocation3], 1
    %14 = vsyncpa %s13, 0
    %15 = vsyncpa [#allocation6], 0
    %16 = vsyncpa [#allocation4], 0
    %s17 = scalar_lea.sflag [#allocation4], 1
    %18 = vsyncpa %s17, 0
    loop: start=0, step=1, limit=4
    $region2: #{attention_pallas.1} parent=1 // loop_pre_header
      _
    $region3: #{attention_pallas.1} parent=1 // loop_header
      %s20 = sphi 0, %s24
      %p21 = scmp.ge.s32.totalorder %s20, 4
      %s30 = sphi 0, %s32
      %s33 = sphi 0, %s30
      %s34 = sphi 0, %s33
      %s50 = sphi 0, %s34
      %s56 = sphi 0, %s58
      %s59 = sphi 0, %s56
      %s60 = sphi 0, %s59
      %s76 = sphi 0, %s60
      %s80 = sphi 0, %s80
      %s82 = sphi 0, %s80
      %s83 = sphi 0, %s82
      %s97 = sphi 0, %s83
      %s101 = sphi 0, %s101
      %s103 = sphi 0, %s101
      %s104 = sphi 0, %s103
      %s118 = sphi 0, %s104
      %s122 = sphi 0, %s122
      %s124 = sphi 0, %s122
      %s125 = sphi 0, %s124
      %s139 = sphi 0, %s125
      %s145 = sphi 0, %s147
      %s148 = sphi 0, %s145
      %s149 = sphi 0, %s148
      %s165 = sphi 0, %s149
      %s171 = sphi 0, %s173
      %s174 = sphi 0, %s171
      %s175 = sphi 0, %s174
      %s191 = sphi 0, %s175
    $region4: #{attention_pallas.1} parent=1 // loop_header_branch
      %23 = sbr.rel (%p21) target = $region8
    $region5: #{attention_pallas.1} parent=1 // loop_body
      %s25 = ssub.s32 %s20, 1
      %s26 = ssub.s32 %s20, 2
      %s27 = sadd.s32 %s20, 1
      %s28 = ssub.s32 %s20, %s27
      %p29 = scmp.eq.s32.totalorder %s28, 0
      %s31 = sadd.s32 %s30, 1
      %s32 = scalar_select %p29, %s30, %s31
      %p35 = pneg %p29
      %p36 = scmp.eq.s32.totalorder %s20, 1
      %p37 = por %p35, %p36
      %p38 = scmp.ne.s32.totalorder %s30, %s33
      %p39 = scmp.eq.s32.totalorder %s20, 0
      %p40 = por %p38, %p39
      %p41 = scmp.ne.s32.totalorder %s30, %s33
      %p42 = scmp.eq.s32.totalorder %s25, 1
      %p43 = por %p41, %p42
      %p44 = scmp.ne.s32.totalorder %s33, %s34
      %p45 = scmp.eq.s32.totalorder %s25, 0
      %p46 = por %p44, %p45
      %p47 = scmp.ne.s32.totalorder %s33, %s34
      %p48 = scmp.eq.s32.totalorder %s26, 1
      %p49 = por %p47, %p48
      %p51 = scmp.ne.s32.totalorder %s34, %s50
      %p52 = scmp.eq.s32.totalorder %s26, 0
      %p53 = por %p51, %p52
      %s54 = ssub.s32 %s20, %s27
      %p55 = scmp.eq.s32.totalorder %s54, 0
      %s57 = sadd.s32 %s56, 1
      %s58 = scalar_select %p55, %s56, %s57
      %p61 = pneg %p55
      %p62 = scmp.eq.s32.totalorder %s20, 1
      %p63 = por %p61, %p62
      %p64 = scmp.ne.s32.totalorder %s56, %s59
      %p65 = scmp.eq.s32.totalorder %s20, 0
      %p66 = por %p64, %p65
      %p67 = scmp.ne.s32.totalorder %s56, %s59
      %p68 = scmp.eq.s32.totalorder %s25, 1
      %p69 = por %p67, %p68
      %p70 = scmp.ne.s32.totalorder %s59, %s60
      %p71 = scmp.eq.s32.totalorder %s25, 0
      %p72 = por %p70, %p71
      %p73 = scmp.ne.s32.totalorder %s59, %s60
      %p74 = scmp.eq.s32.totalorder %s26, 1
      %p75 = por %p73, %p74
      %p77 = scmp.ne.s32.totalorder %s60, %s76
      %p78 = scmp.eq.s32.totalorder %s26, 0
      %p79 = por %p77, %p78
      %s81 = sadd.s32 %s80, 1
      %p84 = scmp.eq.s32.totalorder %s20, 1
      %p85 = scmp.ne.s32.totalorder %s80, %s82
      %p86 = scmp.eq.s32.totalorder %s20, 0
      %p87 = por %p85, %p86
      %p88 = scmp.ne.s32.totalorder %s80, %s82
      %p89 = scmp.eq.s32.totalorder %s25, 1
      %p90 = por %p88, %p89
      %p91 = scmp.ne.s32.totalorder %s82, %s83
      %p92 = scmp.eq.s32.totalorder %s25, 0
      %p93 = por %p91, %p92
      %p94 = scmp.ne.s32.totalorder %s82, %s83
      %p95 = scmp.eq.s32.totalorder %s26, 1
      %p96 = por %p94, %p95
      %p98 = scmp.ne.s32.totalorder %s83, %s97
      %p99 = scmp.eq.s32.totalorder %s26, 0
      %p100 = por %p98, %p99
      %s102 = sadd.s32 %s101, 1
      %p105 = scmp.eq.s32.totalorder %s20, 1
      %p106 = scmp.ne.s32.totalorder %s101, %s103
      %p107 = scmp.eq.s32.totalorder %s20, 0
      %p108 = por %p106, %p107
      %p109 = scmp.ne.s32.totalorder %s101, %s103
      %p110 = scmp.eq.s32.totalorder %s25, 1
      %p111 = por %p109, %p110
      %p112 = scmp.ne.s32.totalorder %s103, %s104
      %p113 = scmp.eq.s32.totalorder %s25, 0
      %p114 = por %p112, %p113
      %p115 = scmp.ne.s32.totalorder %s103, %s104
      %p116 = scmp.eq.s32.totalorder %s26, 1
      %p117 = por %p115, %p116
      %p119 = scmp.ne.s32.totalorder %s104, %s118
      %p120 = scmp.eq.s32.totalorder %s26, 0
      %p121 = por %p119, %p120
      %s123 = sadd.s32 %s122, 1
      %p126 = scmp.eq.s32.totalorder %s20, 1
      %p127 = scmp.ne.s32.totalorder %s122, %s124
      %p128 = scmp.eq.s32.totalorder %s20, 0
      %p129 = por %p127, %p128
      %p130 = scmp.ne.s32.totalorder %s122, %s124
      %p131 = scmp.eq.s32.totalorder %s25, 1
      %p132 = por %p130, %p131
      %p133 = scmp.ne.s32.totalorder %s124, %s125
      %p134 = scmp.eq.s32.totalorder %s25, 0
      %p135 = por %p133, %p134
      %p136 = scmp.ne.s32.totalorder %s124, %s125
      %p137 = scmp.eq.s32.totalorder %s26, 1
      %p138 = por %p136, %p137
      %p140 = scmp.ne.s32.totalorder %s125, %s139
      %p141 = scmp.eq.s32.totalorder %s26, 0
      %p142 = por %p140, %p141
      %s143 = ssub.s32 %s20, %s27
      %p144 = scmp.eq.s32.totalorder %s143, 0
      %s146 = sadd.s32 %s145, 1
      %s147 = scalar_select %p144, %s145, %s146
      %p150 = pneg %p144
      %p151 = scmp.eq.s32.totalorder %s20, 1
      %p152 = por %p150, %p151
      %p153 = scmp.ne.s32.totalorder %s145, %s148
      %p154 = scmp.eq.s32.totalorder %s20, 0
      %p155 = por %p153, %p154
      %p156 = scmp.ne.s32.totalorder %s145, %s148
      %p157 = scmp.eq.s32.totalorder %s25, 1
      %p158 = por %p156, %p157
      %p159 = scmp.ne.s32.totalorder %s148, %s149
      %p160 = scmp.eq.s32.totalorder %s25, 0
      %p161 = por %p159, %p160
      %p162 = scmp.ne.s32.totalorder %s148, %s149
      %p163 = scmp.eq.s32.totalorder %s26, 1
      %p164 = por %p162, %p163
      %p166 = scmp.ne.s32.totalorder %s149, %s165
      %p167 = scmp.eq.s32.totalorder %s26, 0
      %p168 = por %p166, %p167
      %s169 = ssub.s32 %s20, %s27
      %p170 = scmp.eq.s32.totalorder %s169, 0
      %s172 = sadd.s32 %s171, 1
      %s173 = scalar_select %p170, %s171, %s172
      %p176 = pneg %p170
      %p177 = scmp.eq.s32.totalorder %s20, 1
      %p178 = por %p176, %p177
      %p179 = scmp.ne.s32.totalorder %s171, %s174
      %p180 = scmp.eq.s32.totalorder %s20, 0
      %p181 = por %p179, %p180
      %p182 = scmp.ne.s32.totalorder %s171, %s174
      %p183 = scmp.eq.s32.totalorder %s25, 1
      %p184 = por %p182, %p183
      %p185 = scmp.ne.s32.totalorder %s174, %s175
      %p186 = scmp.eq.s32.totalorder %s25, 0
      %p187 = por %p185, %p186
      %p188 = scmp.ne.s32.totalorder %s174, %s175
      %p189 = scmp.eq.s32.totalorder %s26, 1
      %p190 = por %p188, %p189
      %p192 = scmp.ne.s32.totalorder %s175, %s191
      %p193 = scmp.eq.s32.totalorder %s26, 0
      %p194 = por %p192, %p193
      %p195 = scmp.le.s32.totalorder 1, %s20
      %p196 = scmp.lt.s32.totalorder %s20, 3
      %p197 = pnand %p195, %p196
      %p198 = pneg %p197
      // Predicated region
      $region9: #{attention_pallas.1} parent=5 // pred_check
        _
      $region10: #{attention_pallas.1} parent=5 // pred_check_branch
        %200 = sbr.rel (%p197) target = $region12
      $region11: #{attention_pallas.1} parent=5 // pred_region
        %s201 = ssub.s32 %s20, 1
        // Predicated region
        $region13: #{attention_pallas.1} parent=11 // pred_check
          %p202 = pneg %p93
        $region14: #{attention_pallas.1} parent=11 // pred_check_branch
          %204 = sbr.rel (%p202) target = $region16
        $region15: #{attention_pallas.1} parent=11 // pred_region
          %s206 = ssub.s32 512, 512
          %207 = vsyncadd [#allocation6], %s206
          %s208 = sshll.u32 [#allocation5], 4
          %s209 = int_to_ptr.vmem [resolvable:$true] %s208
          %214 = dma.hbm_to_vmem [thread:$0]  %s2, 512, %s209, [#allocation6], 128, 128, 8
        $region16: #{attention_pallas.1} parent=11 // pred_fallthru
          _
        // Predicated region
        $region17: #{attention_pallas.1} parent=11 // pred_check
          %p215 = pneg %p114
        $region18: #{attention_pallas.1} parent=11 // pred_check_branch
          %217 = sbr.rel (%p215) target = $region20
        $region19: #{attention_pallas.1} parent=11 // pred_region
          _
        $region20: #{attention_pallas.1} parent=11 // pred_fallthru
          _
        // Predicated region
        $region21: #{attention_pallas.1} parent=11 // pred_check
          %p218 = pneg %p135
        $region22: #{attention_pallas.1} parent=11 // pred_check_branch
          %220 = sbr.rel (%p218) target = $region24
        $region23: #{attention_pallas.1} parent=11 // pred_region
          _
        $region24: #{attention_pallas.1} parent=11 // pred_fallthru
          _
      $region12: #{attention_pallas.1} parent=5 // pred_fallthru
        _
      %p221 = scmp.lt.s32.totalorder %s20, 2
      // Predicated region
      $region25: #{attention_pallas.1} parent=5 // pred_check
        %p222 = pneg %p221
      $region26: #{attention_pallas.1} parent=5 // pred_check_branch
        %224 = sbr.rel (%p222) target = $region28
      $region27: #{attention_pallas.1} parent=5 // pred_region
        // Predicated region
        $region29: #{attention_pallas.1} parent=27 // pred_check
          %p225 = pneg %p40
        $region30: #{attention_pallas.1} parent=27 // pred_check_branch
          %227 = sbr.rel (%p225) target = $region32
        $region31: #{attention_pallas.1} parent=27 // pred_region
          %s228 = sand.u32 %s30, 1
          %s229 = scalar_lea.sflag [#allocation3], %s228
          %s230 = sand.u32 %s30, 1
          %s231 = smul.addr %s230, 64
          %s232 = scalar_lea.vmem [#allocation2], %s231
          %s233 = smul.u32 8, %s20
          %s235 = ssub.s32 1024, 1024
          %236 = vsyncadd %s229, %s235
          %s237 = smul.addr %s233, 128
          %s238 = scalar_lea.hbm %s0, %s237
          %s239 = sshll.u32 %s232, 4
          %s240 = int_to_ptr.vmem [resolvable:$true] %s239
          %245 = dma.hbm_to_vmem [thread:$0]  %s238, 1024, %s240, %s229, 128, 128, 8
        $region32: #{attention_pallas.1} parent=27 // pred_fallthru
          _
        // Predicated region
        $region33: #{attention_pallas.1} parent=27 // pred_check
          %p246 = pneg %p66
        $region34: #{attention_pallas.1} parent=27 // pred_check_branch
          %248 = sbr.rel (%p246) target = $region36
        $region35: #{attention_pallas.1} parent=27 // pred_region
          %p249 = scmp.lt.s32.totalorder %s20, 1
          %s250 = scalar_select %p249, %s20, 1
          %s251 = smul.addr %s250, 8
          %s252 = scalar_lea.vmem %s1, %s251
        $region36: #{attention_pallas.1} parent=27 // pred_fallthru
          _
      $region28: #{attention_pallas.1} parent=5 // pred_fallthru
        _
      %p253 = scmp.le.s32.totalorder 1, %s20
      %p254 = scmp.lt.s32.totalorder %s20, 3
      %p255 = pnand %p253, %p254
      %p256 = pneg %p255
      // Predicated region
      $region37: #{attention_pallas.1} parent=5 // pred_check
        _
      $region38: #{attention_pallas.1} parent=5 // pred_check_branch
        %258 = sbr.rel (%p255) target = $region40
      $region39: #{attention_pallas.1} parent=5 // pred_region
        %s259 = ssub.s32 %s20, 1
        %s260 = sand.u32 %s33, 1
        %s261 = scalar_lea.sflag [#allocation3], %s260
        %s262 = sand.u32 %s33, 1
        %s263 = smul.addr %s262, 64
        %s264 = scalar_lea.vmem [#allocation2], %s263
        // Predicated region
        $region41: #{attention_pallas.1} parent=39 // pred_check
          %p265 = pneg %p46
        $region42: #{attention_pallas.1} parent=39 // pred_check_branch
          %267 = sbr.rel (%p265) target = $region44
        $region43: #{attention_pallas.1} parent=39 // pred_region
          %268 = dma.done %s261, 1024
        $region44: #{attention_pallas.1} parent=39 // pred_fallthru
          _
        // Predicated region
        $region45: #{attention_pallas.1} parent=39 // pred_check
          %p269 = pneg %p93
        $region46: #{attention_pallas.1} parent=39 // pred_check_branch
          %271 = sbr.rel (%p269) target = $region48
        $region47: #{attention_pallas.1} parent=39 // pred_region
          %272 = dma.done [#allocation6], 512
        $region48: #{attention_pallas.1} parent=39 // pred_fallthru
          _
        %s273 = sand.u32 %s33, 1
        %s274 = scalar_lea.sflag [#allocation3], %s273
        %s275 = sand.u32 %s33, 1
        %s276 = smul.addr %s275, 64
        %s277 = scalar_lea.vmem [#allocation2], %s276
        %p278 = pneg %p46
        %p279 = pneg %p43
        %p280 = scmp.lt.s32.totalorder %s25, 1
        %s281 = scalar_select %p280, %s25, 1
        %s282 = smul.addr %s281, 8
        %s283 = scalar_lea.vmem %s1, %s282
        %p284 = pneg %p72
        %p285 = pneg %p69
        %p286 = pneg %p93
        %p287 = pneg %p90
        %p288 = pneg %p114
        %p289 = pneg %p111
        %p290 = pneg %p135
        %p291 = pneg %p132
        %p292 = pneg %p161
        %p293 = pneg %p158
        %s294 = sand.u32 %s148, 1
        %s295 = scalar_lea.sflag [#allocation4], %s294
        %s296 = sand.u32 %s148, 1
        %s297 = smul.addr %s296, 8
        %s298 = scalar_lea.vmem [#allocation7], %s297
        %p299 = pneg %p187
        %p300 = pneg %p184
        %p301 = scmp.lt.s32.totalorder %s25, 1
        %s302 = scalar_select %p301, %s25, 1
        %s303 = smul.addr %s302, 8
        %s304 = scalar_lea.vmem %s6, %s303
        %s305 = smul.u32 8, %s25
        %p306 = scmp.lt.s32.totalorder %s25, 1
        %s307 = scalar_select %p306, %s25, 1
        %s308 = smul.addr %s307, 8
        %s309 = scalar_lea.vmem %s1, %s308
        %p310 = scmp.lt.s32.totalorder %s25, 1
        %s311 = scalar_select %p310, %s25, 1
        %s312 = smul.addr %s311, 8
        %s313 = scalar_lea.vmem %s6, %s312
        %v314 = vld [vmem:[%s264] sm:$0xff]
        %v315 = vld [vmem:[%s264 + $0x8] sm:$0xff]
        %v316 = vld [vmem:[%s264 + $0x10] sm:$0xff]
        %v317 = vld [vmem:[%s264 + $0x18] sm:$0xff]
        %v318 = vld [vmem:[%s264 + $0x20] sm:$0xff]
        %v319 = vld [vmem:[%s264 + $0x28] sm:$0xff]
        %v320 = vld [vmem:[%s264 + $0x30] sm:$0xff]
        %v321 = vld [vmem:[%s264 + $0x38] sm:$0xff]
        %v322 = vld [vmem:[#allocation5] sm:$0xff]
        %v323 = vld [vmem:[#allocation5 + $0x8] sm:$0xff]
        %v324 = vld [vmem:[#allocation5 + $0x10] sm:$0xff]
        %v325 = vld [vmem:[#allocation5 + $0x18] sm:$0xff]
        %v326 = vld [vmem:[%s3] sm:$0x1]
        %v328 = vlaneseq
        %v329 = vshrl.u32 %v328, 7
        %v330 = vsub.s32 0, %v329
        %v331 = vrot.slane %v326, %v330
        %vm333 = vcmask 261120
        %v335 = vsel %vm333, %v314, 0
        %v338 = vsel %vm333, %v315, 0
        %v341 = vsel %vm333, %v316, 0
        %v344 = vsel %vm333, %v317, 0
        %v347 = vsel %vm333, %v318, 0
        %v350 = vsel %vm333, %v319, 0
        %v353 = vsel %vm333, %v320, 0
        %v356 = vsel %vm333, %v321, 0
        %358 = vmatprep.subr.mxu0 0.0
        %359 = vmatpush1.msra.mxu0 0.0
        %360 = vmatprep.subr.mxu0 0.0
        %361 = vmatpush1.msra.mxu0 0.0
        %362 = vmatprep.subr.mxu0 0.0
        %363 = vmatpush1.msra.mxu0 0.0
        %364 = vmatprep.subr.mxu0 0.0
        %365 = vmatpush1.msra.mxu0 0.0
        %366 = vmatprep.subr.mxu0 0.0
        %367 = vmatpush1.msra.mxu0 0.0
        %368 = vmatprep.subr.mxu0 0.0
        %369 = vmatpush1.msra.mxu0 0.0
        %370 = vmatprep.subr.mxu0 0.0
        %371 = vmatpush1.msra.mxu0 0.0
        %372 = vmatprep.subr.mxu0 0.0
        %373 = vmatpush1.msra.mxu0 0.0
        %374 = vmatprep.subr.mxu0 0.0
        %375 = vmatpush1.msra.mxu0 0.0
        %376 = vmatprep.subr.mxu0 0.0
        %377 = vmatpush1.msra.mxu0 0.0
        %378 = vmatprep.subr.mxu0 0.0
        %379 = vmatpush1.msra.mxu0 0.0
        %380 = vmatprep.subr.mxu0 0.0
        %381 = vmatpush1.msra.mxu0 0.0
        %382 = vmatprep.subr.mxu0 0.0
        %v383 = vand.u32 %v325, 4294901760
        %384 = vmatpush1.msra.mxu0 %v383
        %385 = vmatprep.subr.mxu0 0.0
        %v386 = vand.u32 %v324, 4294901760
        %387 = vmatpush1.msra.mxu0 %v386
        %388 = vmatprep.subr.mxu0 0.0
        %v389 = vand.u32 %v323, 4294901760
        %390 = vmatpush1.msra.mxu0 %v389
        %391 = vmatprep.subr.mxu0 0.0
        %v392 = vand.u32 %v322, 4294901760
        %393 = vmatpush1.msra.mxu0 %v392
        %394 = vmatprep.subr.mxu0 0.0
        %395 = vmatpush2.msra.mxu0 0.0
        %396 = vmatprep.subr.mxu0 0.0
        %397 = vmatpush2.msra.mxu0 0.0
        %398 = vmatprep.subr.mxu0 0.0
        %399 = vmatpush2.msra.mxu0 0.0
        %400 = vmatprep.subr.mxu0 0.0
        %401 = vmatpush2.msra.mxu0 0.0
        %402 = vmatprep.subr.mxu0 0.0
        %403 = vmatpush2.msra.mxu0 0.0
        %404 = vmatprep.subr.mxu0 0.0
        %405 = vmatpush2.msra.mxu0 0.0
        %406 = vmatprep.subr.mxu0 0.0
        %407 = vmatpush2.msra.mxu0 0.0
        %408 = vmatprep.subr.mxu0 0.0
        %409 = vmatpush2.msra.mxu0 0.0
        %410 = vmatprep.subr.mxu0 0.0
        %411 = vmatpush2.msra.mxu0 0.0
        %412 = vmatprep.subr.mxu0 0.0
        %413 = vmatpush2.msra.mxu0 0.0
        %414 = vmatprep.subr.mxu0 0.0
        %415 = vmatpush2.msra.mxu0 0.0
        %416 = vmatprep.subr.mxu0 0.0
        %417 = vmatpush2.msra.mxu0 0.0
        %418 = vmatprep.subr.mxu0 0.0
        %419 = vmatpush2.msra.mxu0 0.0
        %420 = vmatprep.subr.mxu0 0.0
        %421 = vmatpush2.msra.mxu0 0.0
        %422 = vmatprep.subr.mxu0 0.0
        %423 = vmatpush2.msra.mxu0 0.0
        %424 = vmatprep.subr.mxu0 0.0
        %425 = vmatpush2.msra.mxu0 0.0
        %426 = vmatprep.mubr.f32.mxu0 0.0
        %v427 = vand.u32 %v335, 4294901760
        %v428 = vsub.f32 %v335, %v427
        %v429 = vand.u32 %v428, 4294901760
        %v430 = vsub.f32 %v428, %v429
        %v431 = vand.u32 %v430, 4294901760
        %432 = vmatmul.mubr.f32.gmra.mxu0 %v431
        %v433 = vpop.f32.mrf.mxu0
        %v434 = vadd.f32 %v331, %v433
        %v435 = vpop.f32.mrf.mxu0
        %436 = vmatprep.mubr.f32.mxu0 0.0
        %v437 = vand.u32 %v338, 4294901760
        %v438 = vsub.f32 %v338, %v437
        %v439 = vand.u32 %v438, 4294901760
        %v440 = vsub.f32 %v438, %v439
        %v441 = vand.u32 %v440, 4294901760
        %442 = vmatmul.mubr.f32.gmra.mxu0 %v441
        %v443 = vpop.f32.mrf.mxu0
        %v444 = vadd.f32 %v331, %v443
        %v445 = vpop.f32.mrf.mxu0
        %446 = vmatprep.mubr.f32.mxu0 0.0
        %v447 = vand.u32 %v341, 4294901760
        %v448 = vsub.f32 %v341, %v447
        %v449 = vand.u32 %v448, 4294901760
        %v450 = vsub.f32 %v448, %v449
        %v451 = vand.u32 %v450, 4294901760
        %452 = vmatmul.mubr.f32.gmra.mxu0 %v451
        %v453 = vpop.f32.mrf.mxu0
        %v454 = vadd.f32 %v331, %v453
        %v455 = vpop.f32.mrf.mxu0
        %456 = vmatprep.mubr.f32.mxu0 0.0
        %v457 = vand.u32 %v344, 4294901760
        %v458 = vsub.f32 %v344, %v457
        %v459 = vand.u32 %v458, 4294901760
        %v460 = vsub.f32 %v458, %v459
        %v461 = vand.u32 %v460, 4294901760
        %462 = vmatmul.mubr.f32.gmra.mxu0 %v461
        %v463 = vpop.f32.mrf.mxu0
        %v464 = vadd.f32 %v331, %v463
        %v465 = vpop.f32.mrf.mxu0
        %466 = vmatprep.mubr.f32.mxu0 0.0
        %v467 = vand.u32 %v347, 4294901760
        %v468 = vsub.f32 %v347, %v467
        %v469 = vand.u32 %v468, 4294901760
        %v470 = vsub.f32 %v468, %v469
        %v471 = vand.u32 %v470, 4294901760
        %472 = vmatmul.mubr.f32.gmra.mxu0 %v471
        %v473 = vpop.f32.mrf.mxu0
        %v474 = vadd.f32 %v331, %v473
        %v475 = vpop.f32.mrf.mxu0
        %476 = vmatprep.mubr.f32.mxu0 0.0
        %v477 = vand.u32 %v350, 4294901760
        %v478 = vsub.f32 %v350, %v477
        %v479 = vand.u32 %v478, 4294901760
        %v480 = vsub.f32 %v478, %v479
        %v481 = vand.u32 %v480, 4294901760
        %482 = vmatmul.mubr.f32.gmra.mxu0 %v481
        %v483 = vpop.f32.mrf.mxu0
        %v484 = vadd.f32 %v331, %v483
        %v485 = vpop.f32.mrf.mxu0
        %486 = vmatprep.mubr.f32.mxu0 0.0
        %v487 = vand.u32 %v353, 4294901760
        %v488 = vsub.f32 %v353, %v487
        %v489 = vand.u32 %v488, 4294901760
        %v490 = vsub.f32 %v488, %v489
        %v491 = vand.u32 %v490, 4294901760
        %492 = vmatmul.mubr.f32.gmra.mxu0 %v491
        %v493 = vpop.f32.mrf.mxu0
        %v494 = vadd.f32 %v331, %v493
        %v495 = vpop.f32.mrf.mxu0
        %496 = vmatprep.mubr.f32.mxu0 0.0
        %v497 = vand.u32 %v356, 4294901760
        %v498 = vsub.f32 %v356, %v497
        %v499 = vand.u32 %v498, 4294901760
        %v500 = vsub.f32 %v498, %v499
        %v501 = vand.u32 %v500, 4294901760
        %502 = vmatmul.mubr.f32.gmra.mxu0 %v501
        %v503 = vpop.f32.mrf.mxu0
        %v504 = vadd.f32 %v331, %v503
        %v505 = vpop.f32.mrf.mxu0
        %506 = vdwg.mxu0
        %507 = vmatprep.subr.mxu0 0.0
        %508 = vmatpush1.msra.mxu0 0.0
        %509 = vmatprep.subr.mxu0 0.0
        %510 = vmatpush1.msra.mxu0 0.0
        %511 = vmatprep.subr.mxu0 0.0
        %512 = vmatpush1.msra.mxu0 0.0
        %513 = vmatprep.subr.mxu0 0.0
        %514 = vmatpush1.msra.mxu0 0.0
        %515 = vmatprep.subr.mxu0 0.0
        %516 = vmatpush1.msra.mxu0 0.0
        %517 = vmatprep.subr.mxu0 0.0
        %518 = vmatpush1.msra.mxu0 0.0
        %519 = vmatprep.subr.mxu0 0.0
        %520 = vmatpush1.msra.mxu0 0.0
        %521 = vmatprep.subr.mxu0 0.0
        %522 = vmatpush1.msra.mxu0 0.0
        %523 = vmatprep.subr.mxu0 0.0
        %524 = vmatpush1.msra.mxu0 0.0
        %525 = vmatprep.subr.mxu0 0.0
        %526 = vmatpush1.msra.mxu0 0.0
        %527 = vmatprep.subr.mxu0 0.0
        %528 = vmatpush1.msra.mxu0 0.0
        %529 = vmatprep.subr.mxu0 0.0
        %530 = vmatpush1.msra.mxu0 0.0
        %531 = vmatprep.subr.mxu0 0.0
        %v532 = vand.u32 %v325, 4294901760
        %v533 = vsub.f32 %v325, %v532
        %v534 = vand.u32 %v533, 4294901760
        %v535 = vsub.f32 %v533, %v534
        %v536 = vand.u32 %v535, 4294901760
        %537 = vmatpush1.msra.mxu0 %v536
        %538 = vmatprep.subr.mxu0 0.0
        %v539 = vand.u32 %v324, 4294901760
        %v540 = vsub.f32 %v324, %v539
        %v541 = vand.u32 %v540, 4294901760
        %v542 = vsub.f32 %v540, %v541
        %v543 = vand.u32 %v542, 4294901760
        %544 = vmatpush1.msra.mxu0 %v543
        %545 = vmatprep.subr.mxu0 0.0
        %v546 = vand.u32 %v323, 4294901760
        %v547 = vsub.f32 %v323, %v546
        %v548 = vand.u32 %v547, 4294901760
        %v549 = vsub.f32 %v547, %v548
        %v550 = vand.u32 %v549, 4294901760
        %551 = vmatpush1.msra.mxu0 %v550
        %552 = vmatprep.subr.mxu0 0.0
        %v553 = vand.u32 %v322, 4294901760
        %v554 = vsub.f32 %v322, %v553
        %v555 = vand.u32 %v554, 4294901760
        %v556 = vsub.f32 %v554, %v555
        %v557 = vand.u32 %v556, 4294901760
        %558 = vmatpush1.msra.mxu0 %v557
        %559 = vmatprep.subr.mxu0 0.0
        %560 = vmatpush2.msra.mxu0 0.0
        %561 = vmatprep.subr.mxu0 0.0
        %562 = vmatpush2.msra.mxu0 0.0
        %563 = vmatprep.subr.mxu0 0.0
        %564 = vmatpush2.msra.mxu0 0.0
        %565 = vmatprep.subr.mxu0 0.0
        %566 = vmatpush2.msra.mxu0 0.0
        %567 = vmatprep.subr.mxu0 0.0
        %568 = vmatpush2.msra.mxu0 0.0
        %569 = vmatprep.subr.mxu0 0.0
        %570 = vmatpush2.msra.mxu0 0.0
        %571 = vmatprep.subr.mxu0 0.0
        %572 = vmatpush2.msra.mxu0 0.0
        %573 = vmatprep.subr.mxu0 0.0
        %574 = vmatpush2.msra.mxu0 0.0
        %575 = vmatprep.subr.mxu0 0.0
        %576 = vmatpush2.msra.mxu0 0.0
        %577 = vmatprep.subr.mxu0 0.0
        %578 = vmatpush2.msra.mxu0 0.0
        %579 = vmatprep.subr.mxu0 0.0
        %580 = vmatpush2.msra.mxu0 0.0
        %581 = vmatprep.subr.mxu0 0.0
        %582 = vmatpush2.msra.mxu0 0.0
        %583 = vmatprep.subr.mxu0 0.0
        %584 = vmatpush2.msra.mxu0 0.0
        %585 = vmatprep.subr.mxu0 0.0
        %586 = vmatpush2.msra.mxu0 0.0
        %587 = vmatprep.subr.mxu0 0.0
        %588 = vmatpush2.msra.mxu0 0.0
        %589 = vmatprep.subr.mxu0 0.0
        %590 = vmatpush2.msra.mxu0 0.0
        %591 = vmatprep.mubr.f32.mxu0 0.0
        %v592 = vand.u32 %v335, 4294901760
        %593 = vmatmul.mubr.f32.gmra.mxu0 %v592
        %v594 = vpop.f32.mrf.mxu0
        %v595 = vadd.f32 %v434, %v594
        %v596 = vpop.f32.mrf.mxu0
        %597 = vmatprep.mubr.f32.mxu0 0.0
        %v598 = vand.u32 %v338, 4294901760
        %599 = vmatmul.mubr.f32.gmra.mxu0 %v598
        %v600 = vpop.f32.mrf.mxu0
        %v601 = vadd.f32 %v444, %v600
        %v602 = vpop.f32.mrf.mxu0
        %603 = vmatprep.mubr.f32.mxu0 0.0
        %v604 = vand.u32 %v341, 4294901760
        %605 = vmatmul.mubr.f32.gmra.mxu0 %v604
        %v606 = vpop.f32.mrf.mxu0
        %v607 = vadd.f32 %v454, %v606
        %v608 = vpop.f32.mrf.mxu0
        %609 = vmatprep.mubr.f32.mxu0 0.0
        %v610 = vand.u32 %v344, 4294901760
        %611 = vmatmul.mubr.f32.gmra.mxu0 %v610
        %v612 = vpop.f32.mrf.mxu0
        %v613 = vadd.f32 %v464, %v612
        %v614 = vpop.f32.mrf.mxu0
        %615 = vmatprep.mubr.f32.mxu0 0.0
        %v616 = vand.u32 %v347, 4294901760
        %617 = vmatmul.mubr.f32.gmra.mxu0 %v616
        %v618 = vpop.f32.mrf.mxu0
        %v619 = vadd.f32 %v474, %v618
        %v620 = vpop.f32.mrf.mxu0
        %621 = vmatprep.mubr.f32.mxu0 0.0
        %v622 = vand.u32 %v350, 4294901760
        %623 = vmatmul.mubr.f32.gmra.mxu0 %v622
        %v624 = vpop.f32.mrf.mxu0
        %v625 = vadd.f32 %v484, %v624
        %v626 = vpop.f32.mrf.mxu0
        %627 = vmatprep.mubr.f32.mxu0 0.0
        %v628 = vand.u32 %v353, 4294901760
        %629 = vmatmul.mubr.f32.gmra.mxu0 %v628
        %v630 = vpop.f32.mrf.mxu0
        %v631 = vadd.f32 %v494, %v630
        %v632 = vpop.f32.mrf.mxu0
        %633 = vmatprep.mubr.f32.mxu0 0.0
        %v634 = vand.u32 %v356, 4294901760
        %635 = vmatmul.mubr.f32.gmra.mxu0 %v634
        %v636 = vpop.f32.mrf.mxu0
        %v637 = vadd.f32 %v504, %v636
        %v638 = vpop.f32.mrf.mxu0
        %639 = vdwg.mxu0
        %640 = vmatprep.subr.mxu0 0.0
        %641 = vmatpush1.msra.mxu0 0.0
        %642 = vmatprep.subr.mxu0 0.0
        %643 = vmatpush1.msra.mxu0 0.0
        %644 = vmatprep.subr.mxu0 0.0
        %645 = vmatpush1.msra.mxu0 0.0
        %646 = vmatprep.subr.mxu0 0.0
        %647 = vmatpush1.msra.mxu0 0.0
        %648 = vmatprep.subr.mxu0 0.0
        %649 = vmatpush1.msra.mxu0 0.0
        %650 = vmatprep.subr.mxu0 0.0
        %651 = vmatpush1.msra.mxu0 0.0
        %652 = vmatprep.subr.mxu0 0.0
        %653 = vmatpush1.msra.mxu0 0.0
        %654 = vmatprep.subr.mxu0 0.0
        %655 = vmatpush1.msra.mxu0 0.0
        %656 = vmatprep.subr.mxu0 0.0
        %657 = vmatpush1.msra.mxu0 0.0
        %658 = vmatprep.subr.mxu0 0.0
        %659 = vmatpush1.msra.mxu0 0.0
        %660 = vmatprep.subr.mxu0 0.0
        %661 = vmatpush1.msra.mxu0 0.0
        %662 = vmatprep.subr.mxu0 0.0
        %663 = vmatpush1.msra.mxu0 0.0
        %664 = vmatprep.subr.mxu0 0.0
        %v665 = vand.u32 %v325, 4294901760
        %v666 = vsub.f32 %v325, %v665
        %667 = vmatpush1.msra.mxu0 %v666
        %668 = vmatprep.subr.mxu0 0.0
        %v669 = vand.u32 %v324, 4294901760
        %v670 = vsub.f32 %v324, %v669
        %671 = vmatpush1.msra.mxu0 %v670
        %672 = vmatprep.subr.mxu0 0.0
        %v673 = vand.u32 %v323, 4294901760
        %v674 = vsub.f32 %v323, %v673
        %675 = vmatpush1.msra.mxu0 %v674
        %676 = vmatprep.subr.mxu0 0.0
        %v677 = vand.u32 %v322, 4294901760
        %v678 = vsub.f32 %v322, %v677
        %679 = vmatpush1.msra.mxu0 %v678
        %680 = vmatprep.subr.mxu0 0.0
        %681 = vmatpush2.msra.mxu0 0.0
        %682 = vmatprep.subr.mxu0 0.0
        %683 = vmatpush2.msra.mxu0 0.0
        %684 = vmatprep.subr.mxu0 0.0
        %685 = vmatpush2.msra.mxu0 0.0
        %686 = vmatprep.subr.mxu0 0.0
        %687 = vmatpush2.msra.mxu0 0.0
        %688 = vmatprep.subr.mxu0 0.0
        %689 = vmatpush2.msra.mxu0 0.0
        %690 = vmatprep.subr.mxu0 0.0
        %691 = vmatpush2.msra.mxu0 0.0
        %692 = vmatprep.subr.mxu0 0.0
        %693 = vmatpush2.msra.mxu0 0.0
        %694 = vmatprep.subr.mxu0 0.0
        %695 = vmatpush2.msra.mxu0 0.0
        %696 = vmatprep.subr.mxu0 0.0
        %697 = vmatpush2.msra.mxu0 0.0
        %698 = vmatprep.subr.mxu0 0.0
        %699 = vmatpush2.msra.mxu0 0.0
        %700 = vmatprep.subr.mxu0 0.0
        %701 = vmatpush2.msra.mxu0 0.0
        %702 = vmatprep.subr.mxu0 0.0
        %703 = vmatpush2.msra.mxu0 0.0
        %704 = vmatprep.subr.mxu0 0.0
        %705 = vmatpush2.msra.mxu0 0.0
        %706 = vmatprep.subr.mxu0 0.0
        %707 = vmatpush2.msra.mxu0 0.0
        %708 = vmatprep.subr.mxu0 0.0
        %709 = vmatpush2.msra.mxu0 0.0
        %710 = vmatprep.subr.mxu0 0.0
        %711 = vmatpush2.msra.mxu0 0.0
        %712 = vmatprep.mubr.f32.mxu0 0.0
        %v713 = vand.u32 %v335, 4294901760
        %v714 = vsub.f32 %v335, %v713
        %715 = vmatmul.mubr.f32.gmra.mxu0 %v714
        %v716 = vpop.f32.mrf.mxu0
        %v717 = vadd.f32 %v595, %v716
        %v718 = vpop.f32.mrf.mxu0
        %719 = vmatprep.mubr.f32.mxu0 0.0
        %v720 = vand.u32 %v338, 4294901760
        %v721 = vsub.f32 %v338, %v720
        %722 = vmatmul.mubr.f32.gmra.mxu0 %v721
        %v723 = vpop.f32.mrf.mxu0
        %v724 = vadd.f32 %v601, %v723
        %v725 = vpop.f32.mrf.mxu0
        %726 = vmatprep.mubr.f32.mxu0 0.0
        %v727 = vand.u32 %v341, 4294901760
        %v728 = vsub.f32 %v341, %v727
        %729 = vmatmul.mubr.f32.gmra.mxu0 %v728
        %v730 = vpop.f32.mrf.mxu0
        %v731 = vadd.f32 %v607, %v730
        %v732 = vpop.f32.mrf.mxu0
        %733 = vmatprep.mubr.f32.mxu0 0.0
        %v734 = vand.u32 %v344, 4294901760
        %v735 = vsub.f32 %v344, %v734
        %736 = vmatmul.mubr.f32.gmra.mxu0 %v735
        %v737 = vpop.f32.mrf.mxu0
        %v738 = vadd.f32 %v613, %v737
        %v739 = vpop.f32.mrf.mxu0
        %740 = vmatprep.mubr.f32.mxu0 0.0
        %v741 = vand.u32 %v347, 4294901760
        %v742 = vsub.f32 %v347, %v741
        %743 = vmatmul.mubr.f32.gmra.mxu0 %v742
        %v744 = vpop.f32.mrf.mxu0
        %v745 = vadd.f32 %v619, %v744
        %v746 = vpop.f32.mrf.mxu0
        %747 = vmatprep.mubr.f32.mxu0 0.0
        %v748 = vand.u32 %v350, 4294901760
        %v749 = vsub.f32 %v350, %v748
        %750 = vmatmul.mubr.f32.gmra.mxu0 %v749
        %v751 = vpop.f32.mrf.mxu0
        %v752 = vadd.f32 %v625, %v751
        %v753 = vpop.f32.mrf.mxu0
        %754 = vmatprep.mubr.f32.mxu0 0.0
        %v755 = vand.u32 %v353, 4294901760
        %v756 = vsub.f32 %v353, %v755
        %757 = vmatmul.mubr.f32.gmra.mxu0 %v756
        %v758 = vpop.f32.mrf.mxu0
        %v759 = vadd.f32 %v631, %v758
        %v760 = vpop.f32.mrf.mxu0
        %761 = vmatprep.mubr.f32.mxu0 0.0
        %v762 = vand.u32 %v356, 4294901760
        %v763 = vsub.f32 %v356, %v762
        %764 = vmatmul.mubr.f32.gmra.mxu0 %v763
        %v765 = vpop.f32.mrf.mxu0
        %v766 = vadd.f32 %v637, %v765
        %v767 = vpop.f32.mrf.mxu0
        %768 = vdwg.mxu0
        %769 = vmatprep.subr.mxu0 0.0
        %770 = vmatpush1.msra.mxu0 0.0
        %771 = vmatprep.subr.mxu0 0.0
        %772 = vmatpush1.msra.mxu0 0.0
        %773 = vmatprep.subr.mxu0 0.0
        %774 = vmatpush1.msra.mxu0 0.0
        %775 = vmatprep.subr.mxu0 0.0
        %776 = vmatpush1.msra.mxu0 0.0
        %777 = vmatprep.subr.mxu0 0.0
        %778 = vmatpush1.msra.mxu0 0.0
        %779 = vmatprep.subr.mxu0 0.0
        %780 = vmatpush1.msra.mxu0 0.0
        %781 = vmatprep.subr.mxu0 0.0
        %782 = vmatpush1.msra.mxu0 0.0
        %783 = vmatprep.subr.mxu0 0.0
        %784 = vmatpush1.msra.mxu0 0.0
        %785 = vmatprep.subr.mxu0 0.0
        %786 = vmatpush1.msra.mxu0 0.0
        %787 = vmatprep.subr.mxu0 0.0
        %788 = vmatpush1.msra.mxu0 0.0
        %789 = vmatprep.subr.mxu0 0.0
        %790 = vmatpush1.msra.mxu0 0.0
        %791 = vmatprep.subr.mxu0 0.0
        %792 = vmatpush1.msra.mxu0 0.0
        %793 = vmatprep.subr.mxu0 0.0
        %v794 = vand.u32 %v325, 4294901760
        %795 = vmatpush1.msra.mxu0 %v794
        %796 = vmatprep.subr.mxu0 0.0
        %v797 = vand.u32 %v324, 4294901760
        %798 = vmatpush1.msra.mxu0 %v797
        %799 = vmatprep.subr.mxu0 0.0
        %v800 = vand.u32 %v323, 4294901760
        %801 = vmatpush1.msra.mxu0 %v800
        %802 = vmatprep.subr.mxu0 0.0
        %v803 = vand.u32 %v322, 4294901760
        %804 = vmatpush1.msra.mxu0 %v803
        %805 = vmatprep.subr.mxu0 0.0
        %806 = vmatpush2.msra.mxu0 0.0
        %807 = vmatprep.subr.mxu0 0.0
        %808 = vmatpush2.msra.mxu0 0.0
        %809 = vmatprep.subr.mxu0 0.0
        %810 = vmatpush2.msra.mxu0 0.0
        %811 = vmatprep.subr.mxu0 0.0
        %812 = vmatpush2.msra.mxu0 0.0
        %813 = vmatprep.subr.mxu0 0.0
        %814 = vmatpush2.msra.mxu0 0.0
        %815 = vmatprep.subr.mxu0 0.0
        %816 = vmatpush2.msra.mxu0 0.0
        %817 = vmatprep.subr.mxu0 0.0
        %818 = vmatpush2.msra.mxu0 0.0
        %819 = vmatprep.subr.mxu0 0.0
        %820 = vmatpush2.msra.mxu0 0.0
        %821 = vmatprep.subr.mxu0 0.0
        %822 = vmatpush2.msra.mxu0 0.0
        %823 = vmatprep.subr.mxu0 0.0
        %824 = vmatpush2.msra.mxu0 0.0
        %825 = vmatprep.subr.mxu0 0.0
        %826 = vmatpush2.msra.mxu0 0.0
        %827 = vmatprep.subr.mxu0 0.0
        %828 = vmatpush2.msra.mxu0 0.0
        %829 = vmatprep.subr.mxu0 0.0
        %830 = vmatpush2.msra.mxu0 0.0
        %831 = vmatprep.subr.mxu0 0.0
        %832 = vmatpush2.msra.mxu0 0.0
        %833 = vmatprep.subr.mxu0 0.0
        %834 = vmatpush2.msra.mxu0 0.0
        %835 = vmatprep.subr.mxu0 0.0
        %836 = vmatpush2.msra.mxu0 0.0
        %837 = vmatprep.mubr.f32.mxu0 0.0
        %v838 = vand.u32 %v335, 4294901760
        %v839 = vsub.f32 %v335, %v838
        %v840 = vand.u32 %v839, 4294901760
        %841 = vmatmul.mubr.f32.gmra.mxu0 %v840
        %v842 = vpop.f32.mrf.mxu0
        %v843 = vadd.f32 %v717, %v842
        %v844 = vpop.f32.mrf.mxu0
        %845 = vmatprep.mubr.f32.mxu0 0.0
        %v846 = vand.u32 %v338, 4294901760
        %v847 = vsub.f32 %v338, %v846
        %v848 = vand.u32 %v847, 4294901760
        %849 = vmatmul.mubr.f32.gmra.mxu0 %v848
        %v850 = vpop.f32.mrf.mxu0
        %v851 = vadd.f32 %v724, %v850
        %v852 = vpop.f32.mrf.mxu0
        %853 = vmatprep.mubr.f32.mxu0 0.0
        %v854 = vand.u32 %v341, 4294901760
        %v855 = vsub.f32 %v341, %v854
        %v856 = vand.u32 %v855, 4294901760
        %857 = vmatmul.mubr.f32.gmra.mxu0 %v856
        %v858 = vpop.f32.mrf.mxu0
        %v859 = vadd.f32 %v731, %v858
        %v860 = vpop.f32.mrf.mxu0
        %861 = vmatprep.mubr.f32.mxu0 0.0
        %v862 = vand.u32 %v344, 4294901760
        %v863 = vsub.f32 %v344, %v862
        %v864 = vand.u32 %v863, 4294901760
        %865 = vmatmul.mubr.f32.gmra.mxu0 %v864
        %v866 = vpop.f32.mrf.mxu0
        %v867 = vadd.f32 %v738, %v866
        %v868 = vpop.f32.mrf.mxu0
        %869 = vmatprep.mubr.f32.mxu0 0.0
        %v870 = vand.u32 %v347, 4294901760
        %v871 = vsub.f32 %v347, %v870
        %v872 = vand.u32 %v871, 4294901760
        %873 = vmatmul.mubr.f32.gmra.mxu0 %v872
        %v874 = vpop.f32.mrf.mxu0
        %v875 = vadd.f32 %v745, %v874
        %v876 = vpop.f32.mrf.mxu0
        %877 = vmatprep.mubr.f32.mxu0 0.0
        %v878 = vand.u32 %v350, 4294901760
        %v879 = vsub.f32 %v350, %v878
        %v880 = vand.u32 %v879, 4294901760
        %881 = vmatmul.mubr.f32.gmra.mxu0 %v880
        %v882 = vpop.f32.mrf.mxu0
        %v883 = vadd.f32 %v752, %v882
        %v884 = vpop.f32.mrf.mxu0
        %885 = vmatprep.mubr.f32.mxu0 0.0
        %v886 = vand.u32 %v353, 4294901760
        %v887 = vsub.f32 %v353, %v886
        %v888 = vand.u32 %v887, 4294901760
        %889 = vmatmul.mubr.f32.gmra.mxu0 %v888
        %v890 = vpop.f32.mrf.mxu0
        %v891 = vadd.f32 %v759, %v890
        %v892 = vpop.f32.mrf.mxu0
        %893 = vmatprep.mubr.f32.mxu0 0.0
        %v894 = vand.u32 %v356, 4294901760
        %v895 = vsub.f32 %v356, %v894
        %v896 = vand.u32 %v895, 4294901760
        %897 = vmatmul.mubr.f32.gmra.mxu0 %v896
        %v898 = vpop.f32.mrf.mxu0
        %v899 = vadd.f32 %v766, %v898
        %v900 = vpop.f32.mrf.mxu0
        %901 = vdwg.mxu0
        %902 = vmatprep.subr.mxu0 0.0
        %903 = vmatpush1.msra.mxu0 0.0
        %904 = vmatprep.subr.mxu0 0.0
        %905 = vmatpush1.msra.mxu0 0.0
        %906 = vmatprep.subr.mxu0 0.0
        %907 = vmatpush1.msra.mxu0 0.0
        %908 = vmatprep.subr.mxu0 0.0
        %909 = vmatpush1.msra.mxu0 0.0
        %910 = vmatprep.subr.mxu0 0.0
        %911 = vmatpush1.msra.mxu0 0.0
        %912 = vmatprep.subr.mxu0 0.0
        %913 = vmatpush1.msra.mxu0 0.0
        %914 = vmatprep.subr.mxu0 0.0
        %915 = vmatpush1.msra.mxu0 0.0
        %916 = vmatprep.subr.mxu0 0.0
        %917 = vmatpush1.msra.mxu0 0.0
        %918 = vmatprep.subr.mxu0 0.0
        %919 = vmatpush1.msra.mxu0 0.0
        %920 = vmatprep.subr.mxu0 0.0
        %921 = vmatpush1.msra.mxu0 0.0
        %922 = vmatprep.subr.mxu0 0.0
        %923 = vmatpush1.msra.mxu0 0.0
        %924 = vmatprep.subr.mxu0 0.0
        %925 = vmatpush1.msra.mxu0 0.0
        %926 = vmatprep.subr.mxu0 0.0
        %v927 = vand.u32 %v325, 4294901760
        %v928 = vsub.f32 %v325, %v927
        %v929 = vand.u32 %v928, 4294901760
        %930 = vmatpush1.msra.mxu0 %v929
        %931 = vmatprep.subr.mxu0 0.0
        %v932 = vand.u32 %v324, 4294901760
        %v933 = vsub.f32 %v324, %v932
        %v934 = vand.u32 %v933, 4294901760
        %935 = vmatpush1.msra.mxu0 %v934
        %936 = vmatprep.subr.mxu0 0.0
        %v937 = vand.u32 %v323, 4294901760
        %v938 = vsub.f32 %v323, %v937
        %v939 = vand.u32 %v938, 4294901760
        %940 = vmatpush1.msra.mxu0 %v939
        %941 = vmatprep.subr.mxu0 0.0
        %v942 = vand.u32 %v322, 4294901760
        %v943 = vsub.f32 %v322, %v942
        %v944 = vand.u32 %v943, 4294901760
        %945 = vmatpush1.msra.mxu0 %v944
        %946 = vmatprep.subr.mxu0 0.0
        %947 = vmatpush2.msra.mxu0 0.0
        %948 = vmatprep.subr.mxu0 0.0
        %949 = vmatpush2.msra.mxu0 0.0
        %950 = vmatprep.subr.mxu0 0.0
        %951 = vmatpush2.msra.mxu0 0.0
        %952 = vmatprep.subr.mxu0 0.0
        %953 = vmatpush2.msra.mxu0 0.0
        %954 = vmatprep.subr.mxu0 0.0
        %955 = vmatpush2.msra.mxu0 0.0
        %956 = vmatprep.subr.mxu0 0.0
        %957 = vmatpush2.msra.mxu0 0.0
        %958 = vmatprep.subr.mxu0 0.0
        %959 = vmatpush2.msra.mxu0 0.0
        %960 = vmatprep.subr.mxu0 0.0
        %961 = vmatpush2.msra.mxu0 0.0
        %962 = vmatprep.subr.mxu0 0.0
        %963 = vmatpush2.msra.mxu0 0.0
        %964 = vmatprep.subr.mxu0 0.0
        %965 = vmatpush2.msra.mxu0 0.0
        %966 = vmatprep.subr.mxu0 0.0
        %967 = vmatpush2.msra.mxu0 0.0
        %968 = vmatprep.subr.mxu0 0.0
        %969 = vmatpush2.msra.mxu0 0.0
        %970 = vmatprep.subr.mxu0 0.0
        %971 = vmatpush2.msra.mxu0 0.0
        %972 = vmatprep.subr.mxu0 0.0
        %973 = vmatpush2.msra.mxu0 0.0
        %974 = vmatprep.subr.mxu0 0.0
        %975 = vmatpush2.msra.mxu0 0.0
        %976 = vmatprep.subr.mxu0 0.0
        %977 = vmatpush2.msra.mxu0 0.0
        %978 = vmatprep.mubr.f32.mxu0 0.0
        %v979 = vand.u32 %v335, 4294901760
        %980 = vmatmul.mubr.f32.gmra.mxu0 %v979
        %v981 = vpop.f32.mrf.mxu0
        %v982 = vadd.f32 %v843, %v981
        %v983 = vpop.f32.mrf.mxu0
        %984 = vmatprep.mubr.f32.mxu0 0.0
        %v985 = vand.u32 %v338, 4294901760
        %986 = vmatmul.mubr.f32.gmra.mxu0 %v985
        %v987 = vpop.f32.mrf.mxu0
        %v988 = vadd.f32 %v851, %v987
        %v989 = vpop.f32.mrf.mxu0
        %990 = vmatprep.mubr.f32.mxu0 0.0
        %v991 = vand.u32 %v341, 4294901760
        %992 = vmatmul.mubr.f32.gmra.mxu0 %v991
        %v993 = vpop.f32.mrf.mxu0
        %v994 = vadd.f32 %v859, %v993
        %v995 = vpop.f32.mrf.mxu0
        %996 = vmatprep.mubr.f32.mxu0 0.0
        %v997 = vand.u32 %v344, 4294901760
        %998 = vmatmul.mubr.f32.gmra.mxu0 %v997
        %v999 = vpop.f32.mrf.mxu0
        %v1000 = vadd.f32 %v867, %v999
        %v1001 = vpop.f32.mrf.mxu0
        %1002 = vmatprep.mubr.f32.mxu0 0.0
        %v1003 = vand.u32 %v347, 4294901760
        %1004 = vmatmul.mubr.f32.gmra.mxu0 %v1003
        %v1005 = vpop.f32.mrf.mxu0
        %v1006 = vadd.f32 %v875, %v1005
        %v1007 = vpop.f32.mrf.mxu0
        %1008 = vmatprep.mubr.f32.mxu0 0.0
        %v1009 = vand.u32 %v350, 4294901760
        %1010 = vmatmul.mubr.f32.gmra.mxu0 %v1009
        %v1011 = vpop.f32.mrf.mxu0
        %v1012 = vadd.f32 %v883, %v1011
        %v1013 = vpop.f32.mrf.mxu0
        %1014 = vmatprep.mubr.f32.mxu0 0.0
        %v1015 = vand.u32 %v353, 4294901760
        %1016 = vmatmul.mubr.f32.gmra.mxu0 %v1015
        %v1017 = vpop.f32.mrf.mxu0
        %v1018 = vadd.f32 %v891, %v1017
        %v1019 = vpop.f32.mrf.mxu0
        %1020 = vmatprep.mubr.f32.mxu0 0.0
        %v1021 = vand.u32 %v356, 4294901760
        %1022 = vmatmul.mubr.f32.gmra.mxu0 %v1021
        %v1023 = vpop.f32.mrf.mxu0
        %v1024 = vadd.f32 %v899, %v1023
        %v1025 = vpop.f32.mrf.mxu0
        %1026 = vdwg.mxu0
        %1027 = vmatprep.subr.mxu0 0.0
        %1028 = vmatpush1.msra.mxu0 0.0
        %1029 = vmatprep.subr.mxu0 0.0
        %1030 = vmatpush1.msra.mxu0 0.0
        %1031 = vmatprep.subr.mxu0 0.0
        %1032 = vmatpush1.msra.mxu0 0.0
        %1033 = vmatprep.subr.mxu0 0.0
        %1034 = vmatpush1.msra.mxu0 0.0
        %1035 = vmatprep.subr.mxu0 0.0
        %1036 = vmatpush1.msra.mxu0 0.0
        %1037 = vmatprep.subr.mxu0 0.0
        %1038 = vmatpush1.msra.mxu0 0.0
        %1039 = vmatprep.subr.mxu0 0.0
        %1040 = vmatpush1.msra.mxu0 0.0
        %1041 = vmatprep.subr.mxu0 0.0
        %1042 = vmatpush1.msra.mxu0 0.0
        %1043 = vmatprep.subr.mxu0 0.0
        %1044 = vmatpush1.msra.mxu0 0.0
        %1045 = vmatprep.subr.mxu0 0.0
        %1046 = vmatpush1.msra.mxu0 0.0
        %1047 = vmatprep.subr.mxu0 0.0
        %1048 = vmatpush1.msra.mxu0 0.0
        %1049 = vmatprep.subr.mxu0 0.0
        %1050 = vmatpush1.msra.mxu0 0.0
        %1051 = vmatprep.subr.mxu0 0.0
        %v1052 = vand.u32 %v325, 4294901760
        %1053 = vmatpush1.msra.mxu0 %v1052
        %1054 = vmatprep.subr.mxu0 0.0
        %v1055 = vand.u32 %v324, 4294901760
        %1056 = vmatpush1.msra.mxu0 %v1055
        %1057 = vmatprep.subr.mxu0 0.0
        %v1058 = vand.u32 %v323, 4294901760
        %1059 = vmatpush1.msra.mxu0 %v1058
        %1060 = vmatprep.subr.mxu0 0.0
        %v1061 = vand.u32 %v322, 4294901760
        %1062 = vmatpush1.msra.mxu0 %v1061
        %1063 = vmatprep.subr.mxu0 0.0
        %1064 = vmatpush2.msra.mxu0 0.0
        %1065 = vmatprep.subr.mxu0 0.0
        %1066 = vmatpush2.msra.mxu0 0.0
        %1067 = vmatprep.subr.mxu0 0.0
        %1068 = vmatpush2.msra.mxu0 0.0
        %1069 = vmatprep.subr.mxu0 0.0
        %1070 = vmatpush2.msra.mxu0 0.0
        %1071 = vmatprep.subr.mxu0 0.0
        %1072 = vmatpush2.msra.mxu0 0.0
        %1073 = vmatprep.subr.mxu0 0.0
        %1074 = vmatpush2.msra.mxu0 0.0
        %1075 = vmatprep.subr.mxu0 0.0
        %1076 = vmatpush2.msra.mxu0 0.0
        %1077 = vmatprep.subr.mxu0 0.0
        %1078 = vmatpush2.msra.mxu0 0.0
        %1079 = vmatprep.subr.mxu0 0.0
        %1080 = vmatpush2.msra.mxu0 0.0
        %1081 = vmatprep.subr.mxu0 0.0
        %1082 = vmatpush2.msra.mxu0 0.0
        %1083 = vmatprep.subr.mxu0 0.0
        %1084 = vmatpush2.msra.mxu0 0.0
        %1085 = vmatprep.subr.mxu0 0.0
        %1086 = vmatpush2.msra.mxu0 0.0
        %1087 = vmatprep.subr.mxu0 0.0
        %1088 = vmatpush2.msra.mxu0 0.0
        %1089 = vmatprep.subr.mxu0 0.0
        %1090 = vmatpush2.msra.mxu0 0.0
        %1091 = vmatprep.subr.mxu0 0.0
        %1092 = vmatpush2.msra.mxu0 0.0
        %1093 = vmatprep.subr.mxu0 0.0
        %1094 = vmatpush2.msra.mxu0 0.0
        %1095 = vmatprep.mubr.f32.mxu0 0.0
        %v1096 = vand.u32 %v335, 4294901760
        %1097 = vmatmul.mubr.f32.gmra.mxu0 %v1096
        %v1098 = vpop.f32.mrf.mxu0
        %v1099 = vadd.f32 %v982, %v1098
        %v1100 = vpop.f32.mrf.mxu0
        %1101 = vmatprep.mubr.f32.mxu0 0.0
        %v1102 = vand.u32 %v338, 4294901760
        %1103 = vmatmul.mubr.f32.gmra.mxu0 %v1102
        %v1104 = vpop.f32.mrf.mxu0
        %v1105 = vadd.f32 %v988, %v1104
        %v1106 = vpop.f32.mrf.mxu0
        %1107 = vmatprep.mubr.f32.mxu0 0.0
        %v1108 = vand.u32 %v341, 4294901760
        %1109 = vmatmul.mubr.f32.gmra.mxu0 %v1108
        %v1110 = vpop.f32.mrf.mxu0
        %v1111 = vadd.f32 %v994, %v1110
        %v1112 = vpop.f32.mrf.mxu0
        %1113 = vmatprep.mubr.f32.mxu0 0.0
        %v1114 = vand.u32 %v344, 4294901760
        %1115 = vmatmul.mubr.f32.gmra.mxu0 %v1114
        %v1116 = vpop.f32.mrf.mxu0
        %v1117 = vadd.f32 %v1000, %v1116
        %v1118 = vpop.f32.mrf.mxu0
        %1119 = vmatprep.mubr.f32.mxu0 0.0
        %v1120 = vand.u32 %v347, 4294901760
        %1121 = vmatmul.mubr.f32.gmra.mxu0 %v1120
        %v1122 = vpop.f32.mrf.mxu0
        %v1123 = vadd.f32 %v1006, %v1122
        %v1124 = vpop.f32.mrf.mxu0
        %1125 = vmatprep.mubr.f32.mxu0 0.0
        %v1126 = vand.u32 %v350, 4294901760
        %1127 = vmatmul.mubr.f32.gmra.mxu0 %v1126
        %v1128 = vpop.f32.mrf.mxu0
        %v1129 = vadd.f32 %v1012, %v1128
        %v1130 = vpop.f32.mrf.mxu0
        %1131 = vmatprep.mubr.f32.mxu0 0.0
        %v1132 = vand.u32 %v353, 4294901760
        %1133 = vmatmul.mubr.f32.gmra.mxu0 %v1132
        %v1134 = vpop.f32.mrf.mxu0
        %v1135 = vadd.f32 %v1018, %v1134
        %v1136 = vpop.f32.mrf.mxu0
        %1137 = vmatprep.mubr.f32.mxu0 0.0
        %v1138 = vand.u32 %v356, 4294901760
        %1139 = vmatmul.mubr.f32.gmra.mxu0 %v1138
        %v1140 = vpop.f32.mrf.mxu0
        %v1141 = vadd.f32 %v1024, %v1140
        %v1142 = vpop.f32.mrf.mxu0
        %1143 = vdwg.mxu0
        %v1144 = vtanh.pop %v1099
        %v1145 = vtanh.pop %v1105
        %v1146 = vtanh.pop %v1111
        %v1147 = vtanh.pop %v1117
        %v1148 = vtanh.pop %v1123
        %v1149 = vtanh.pop %v1129
        %v1150 = vtanh.pop %v1135
        %v1151 = vtanh.pop %v1141
        %v1152 = vld [vmem:[%s4] sm:$0x1]
        %v1154 = vlaneseq
        %v1155 = vshrl.u32 %v1154, 7
        %v1156 = vsub.s32 0, %v1155
        %v1157 = vrot.slane %v1152, %v1156
        %v1159 = vmul.f32 %v1144, %v1157
        %v1160 = vmul.f32 %v1145, %v1157
        %v1161 = vmul.f32 %v1146, %v1157
        %v1162 = vmul.f32 %v1147, %v1157
        %v1163 = vmul.f32 %v1148, %v1157
        %v1164 = vmul.f32 %v1149, %v1157
        %v1165 = vmul.f32 %v1150, %v1157
        %v1166 = vmul.f32 %v1151, %v1157
        %v1167 = vsel %vm333, %v1159, 0.0
        %1168 = vadd.xlane.f32.xlu0 %v1167
        %v1169 = vpop.xlane.xlu0 %1168
        %v1170 = vsel %vm333, %v1160, 0.0
        %1171 = vadd.xlane.f32.xlu0 %v1170
        %v1172 = vpop.xlane.xlu0 %1171
        %v1173 = vsel %vm333, %v1161, 0.0
        %1174 = vadd.xlane.f32.xlu0 %v1173
        %v1175 = vpop.xlane.xlu0 %1174
        %v1176 = vsel %vm333, %v1162, 0.0
        %1177 = vadd.xlane.f32.xlu0 %v1176
        %v1178 = vpop.xlane.xlu0 %1177
        %v1179 = vsel %vm333, %v1163, 0.0
        %1180 = vadd.xlane.f32.xlu0 %v1179
        %v1181 = vpop.xlane.xlu0 %1180
        %v1182 = vsel %vm333, %v1164, 0.0
        %1183 = vadd.xlane.f32.xlu0 %v1182
        %v1184 = vpop.xlane.xlu0 %1183
        %v1185 = vsel %vm333, %v1165, 0.0
        %1186 = vadd.xlane.f32.xlu0 %v1185
        %v1187 = vpop.xlane.xlu0 %1186
        %v1188 = vsel %vm333, %v1166, 0.0
        %1189 = vadd.xlane.f32.xlu0 %v1188
        %v1190 = vpop.xlane.xlu0 %1189
        %v1191 = vlaneseq
        %v1192 = vshrl.u32 %v1191, 7
        %v1193 = vld [vmem:[%s309] sm:$0xff]
        %v1194 = vcombine.high %v1193, %v1193
        %v1196 = vunpack.c.l.s4 1966171168
        %v1197 = vunpack.c.0.s8 %v1196
        %v1198 = vlaneseq
        %v1199 = vshrl.u32 %v1198, 7
        %v1200 = vsub.s32 %v1197, %v1199
        %v1201 = vrot.slane %v1193, %v1200
        %v1203 = vunpack.c.l.s4 1966171168
        %v1204 = vunpack.c.0.s8 %v1203
        %v1205 = vlaneseq
        %v1206 = vshrl.u32 %v1205, 7
        %v1207 = vsub.s32 %v1204, %v1206
        %v1208 = vrot.slane %v1194, %v1207
        %v1209 = vcombine.high %v1201, %v1201
        %v1210 = vcombine.high %v1208, %v1208
        %v1212 = vunpack.c.l.s4 1966171168
        %v1213 = vunpack.c.0.s8 %v1212
        %v1214 = vlaneseq
        %v1215 = vshrl.u32 %v1214, 7
        %v1216 = vsub.s32 %v1213, %v1215
        %v1217 = vrot.slane %v1201, %v1216
        %v1219 = vunpack.c.l.s4 1966171168
        %v1220 = vunpack.c.0.s8 %v1219
        %v1221 = vlaneseq
        %v1222 = vshrl.u32 %v1221, 7
        %v1223 = vsub.s32 %v1220, %v1222
        %v1224 = vrot.slane %v1208, %v1223
        %v1226 = vunpack.c.l.s4 1966171168
        %v1227 = vunpack.c.0.s8 %v1226
        %v1228 = vlaneseq
        %v1229 = vshrl.u32 %v1228, 7
        %v1230 = vsub.s32 %v1227, %v1229
        %v1231 = vrot.slane %v1209, %v1230
        %v1233 = vunpack.c.l.s4 1966171168
        %v1234 = vunpack.c.0.s8 %v1233
        %v1235 = vlaneseq
        %v1236 = vshrl.u32 %v1235, 7
        %v1237 = vsub.s32 %v1234, %v1236
        %v1238 = vrot.slane %v1210, %v1237
        %v1239 = vcombine.high %v1217, %v1217
        %v1240 = vcombine.high %v1224, %v1224
        %v1241 = vcombine.high %v1231, %v1231
        %v1242 = vcombine.high %v1238, %v1238
        %v1243 = vlaneseq
        %v1244 = vshrl.u32 %v1243, 7
        %v1245 = vsub.s32 0, %v1244
        %v1246 = vrot.slane %v1217, %v1245
        %v1247 = vlaneseq
        %v1248 = vshrl.u32 %v1247, 7
        %v1249 = vsub.s32 0, %v1248
        %v1250 = vrot.slane %v1231, %v1249
        %v1251 = vlaneseq
        %v1252 = vshrl.u32 %v1251, 7
        %v1253 = vsub.s32 0, %v1252
        %v1254 = vrot.slane %v1239, %v1253
        %v1255 = vlaneseq
        %v1256 = vshrl.u32 %v1255, 7
        %v1257 = vsub.s32 0, %v1256
        %v1258 = vrot.slane %v1241, %v1257
        %v1259 = vlaneseq
        %v1260 = vshrl.u32 %v1259, 7
        %v1261 = vsub.s32 0, %v1260
        %v1262 = vrot.slane %v1224, %v1261
        %v1263 = vlaneseq
        %v1264 = vshrl.u32 %v1263, 7
        %v1265 = vsub.s32 0, %v1264
        %v1266 = vrot.slane %v1238, %v1265
        %v1267 = vlaneseq
        %v1268 = vshrl.u32 %v1267, 7
        %v1269 = vsub.s32 0, %v1268
        %v1270 = vrot.slane %v1240, %v1269
        %v1271 = vlaneseq
        %v1272 = vshrl.u32 %v1271, 7
        %v1273 = vsub.s32 0, %v1272
        %v1274 = vrot.slane %v1242, %v1273
        %vm1275 = vcmp.ge.s32.totalorder %v1192, %v1246
        %vm1276 = vcmp.ge.s32.totalorder %v1192, %v1250
        %vm1277 = vcmp.ge.s32.totalorder %v1192, %v1254
        %vm1278 = vcmp.ge.s32.totalorder %v1192, %v1258
        %vm1279 = vcmp.ge.s32.totalorder %v1192, %v1262
        %vm1280 = vcmp.ge.s32.totalorder %v1192, %v1266
        %vm1281 = vcmp.ge.s32.totalorder %v1192, %v1270
        %vm1282 = vcmp.ge.s32.totalorder %v1192, %v1274
        %v1283 = vsel %vm1275, -1e+30, %v1169
        %v1284 = vsel %vm1276, -1e+30, %v1172
        %v1285 = vsel %vm1277, -1e+30, %v1175
        %v1286 = vsel %vm1278, -1e+30, %v1178
        %v1287 = vsel %vm1279, -1e+30, %v1181
        %v1288 = vsel %vm1280, -1e+30, %v1184
        %v1289 = vsel %vm1281, -1e+30, %v1187
        %v1290 = vsel %vm1282, -1e+30, %v1190
        %vm1291 = vcmask 7168
        %v1292 = vsel %vm1291, %v1283, -inf
        %v1293 = vrot.slane %v1292, 4
        %v1294 = vmax.f32 %v1292, %v1293
        %v1295 = vrot.slane %v1294, 2
        %v1296 = vmax.f32 %v1294, %v1295
        %v1297 = vrot.slane %v1296, 1
        %v1298 = vmax.f32 %v1296, %v1297
        %v1299 = vsel %vm1291, %v1284, -inf
        %v1300 = vrot.slane %v1299, 4
        %v1301 = vmax.f32 %v1299, %v1300
        %v1302 = vrot.slane %v1301, 2
        %v1303 = vmax.f32 %v1301, %v1302
        %v1304 = vrot.slane %v1303, 1
        %v1305 = vmax.f32 %v1303, %v1304
        %v1306 = vsel %vm1291, %v1285, -inf
        %v1307 = vrot.slane %v1306, 4
        %v1308 = vmax.f32 %v1306, %v1307
        %v1309 = vrot.slane %v1308, 2
        %v1310 = vmax.f32 %v1308, %v1309
        %v1311 = vrot.slane %v1310, 1
        %v1312 = vmax.f32 %v1310, %v1311
        %v1313 = vsel %vm1291, %v1286, -inf
        %v1314 = vrot.slane %v1313, 4
        %v1315 = vmax.f32 %v1313, %v1314
        %v1316 = vrot.slane %v1315, 2
        %v1317 = vmax.f32 %v1315, %v1316
        %v1318 = vrot.slane %v1317, 1
        %v1319 = vmax.f32 %v1317, %v1318
        %v1320 = vsel %vm1291, %v1287, -inf
        %v1321 = vrot.slane %v1320, 4
        %v1322 = vmax.f32 %v1320, %v1321
        %v1323 = vrot.slane %v1322, 2
        %v1324 = vmax.f32 %v1322, %v1323
        %v1325 = vrot.slane %v1324, 1
        %v1326 = vmax.f32 %v1324, %v1325
        %v1327 = vsel %vm1291, %v1288, -inf
        %v1328 = vrot.slane %v1327, 4
        %v1329 = vmax.f32 %v1327, %v1328
        %v1330 = vrot.slane %v1329, 2
        %v1331 = vmax.f32 %v1329, %v1330
        %v1332 = vrot.slane %v1331, 1
        %v1333 = vmax.f32 %v1331, %v1332
        %v1334 = vsel %vm1291, %v1289, -inf
        %v1335 = vrot.slane %v1334, 4
        %v1336 = vmax.f32 %v1334, %v1335
        %v1337 = vrot.slane %v1336, 2
        %v1338 = vmax.f32 %v1336, %v1337
        %v1339 = vrot.slane %v1338, 1
        %v1340 = vmax.f32 %v1338, %v1339
        %v1341 = vsel %vm1291, %v1290, -inf
        %v1342 = vrot.slane %v1341, 4
        %v1343 = vmax.f32 %v1341, %v1342
        %v1344 = vrot.slane %v1343, 2
        %v1345 = vmax.f32 %v1343, %v1344
        %v1346 = vrot.slane %v1345, 1
        %v1347 = vmax.f32 %v1345, %v1346
        %v1348 = vsub.f32 %v1283, %v1298
        %v1349 = vsub.f32 %v1284, %v1305
        %v1350 = vsub.f32 %v1285, %v1312
        %v1351 = vsub.f32 %v1286, %v1319
        %v1352 = vsub.f32 %v1287, %v1326
        %v1353 = vsub.f32 %v1288, %v1333
        %v1354 = vsub.f32 %v1289, %v1340
        %v1355 = vsub.f32 %v1290, %v1347
        %v1356 = vmul.f32 %v1348, 1.442695
        %v1357 = vpow.pop %v1356
        %v1358 = vmul.f32 %v1349, 1.442695
        %v1359 = vpow.pop %v1358
        %v1360 = vmul.f32 %v1350, 1.442695
        %v1361 = vpow.pop %v1360
        %v1362 = vmul.f32 %v1351, 1.442695
        %v1363 = vpow.pop %v1362
        %v1364 = vmul.f32 %v1352, 1.442695
        %v1365 = vpow.pop %v1364
        %v1366 = vmul.f32 %v1353, 1.442695
        %v1367 = vpow.pop %v1366
        %v1368 = vmul.f32 %v1354, 1.442695
        %v1369 = vpow.pop %v1368
        %v1370 = vmul.f32 %v1355, 1.442695
        %v1371 = vpow.pop %v1370
        %v1372 = vsel %vm1291, %v1357, 0.0
        %v1373 = vrot.slane %v1372, 4
        %v1374 = vadd.f32 %v1372, %v1373
        %v1375 = vrot.slane %v1374, 2
        %v1376 = vadd.f32 %v1374, %v1375
        %v1377 = vrot.slane %v1376, 1
        %v1378 = vadd.f32 %v1376, %v1377
        %v1379 = vsel %vm1291, %v1359, 0.0
        %v1380 = vrot.slane %v1379, 4
        %v1381 = vadd.f32 %v1379, %v1380
        %v1382 = vrot.slane %v1381, 2
        %v1383 = vadd.f32 %v1381, %v1382
        %v1384 = vrot.slane %v1383, 1
        %v1385 = vadd.f32 %v1383, %v1384
        %v1386 = vsel %vm1291, %v1361, 0.0
        %v1387 = vrot.slane %v1386, 4
        %v1388 = vadd.f32 %v1386, %v1387
        %v1389 = vrot.slane %v1388, 2
        %v1390 = vadd.f32 %v1388, %v1389
        %v1391 = vrot.slane %v1390, 1
        %v1392 = vadd.f32 %v1390, %v1391
        %v1393 = vsel %vm1291, %v1363, 0.0
        %v1394 = vrot.slane %v1393, 4
        %v1395 = vadd.f32 %v1393, %v1394
        %v1396 = vrot.slane %v1395, 2
        %v1397 = vadd.f32 %v1395, %v1396
        %v1398 = vrot.slane %v1397, 1
        %v1399 = vadd.f32 %v1397, %v1398
        %v1400 = vsel %vm1291, %v1365, 0.0
        %v1401 = vrot.slane %v1400, 4
        %v1402 = vadd.f32 %v1400, %v1401
        %v1403 = vrot.slane %v1402, 2
        %v1404 = vadd.f32 %v1402, %v1403
        %v1405 = vrot.slane %v1404, 1
        %v1406 = vadd.f32 %v1404, %v1405
        %v1407 = vsel %vm1291, %v1367, 0.0
        %v1408 = vrot.slane %v1407, 4
        %v1409 = vadd.f32 %v1407, %v1408
        %v1410 = vrot.slane %v1409, 2
        %v1411 = vadd.f32 %v1409, %v1410
        %v1412 = vrot.slane %v1411, 1
        %v1413 = vadd.f32 %v1411, %v1412
        %v1414 = vsel %vm1291, %v1369, 0.0
        %v1415 = vrot.slane %v1414, 4
        %v1416 = vadd.f32 %v1414, %v1415
        %v1417 = vrot.slane %v1416, 2
        %v1418 = vadd.f32 %v1416, %v1417
        %v1419 = vrot.slane %v1418, 1
        %v1420 = vadd.f32 %v1418, %v1419
        %v1421 = vsel %vm1291, %v1371, 0.0
        %v1422 = vrot.slane %v1421, 4
        %v1423 = vadd.f32 %v1421, %v1422
        %v1424 = vrot.slane %v1423, 2
        %v1425 = vadd.f32 %v1423, %v1424
        %v1426 = vrot.slane %v1425, 1
        %v1427 = vadd.f32 %v1425, %v1426
        %v1428 = vrcp.pop %v1378
        %v1429 = vmul.f32 %v1357, %v1428
        %v1430 = vrcp.pop %v1385
        %v1431 = vmul.f32 %v1359, %v1430
        %v1432 = vrcp.pop %v1392
        %v1433 = vmul.f32 %v1361, %v1432
        %v1434 = vrcp.pop %v1399
        %v1435 = vmul.f32 %v1363, %v1434
        %v1436 = vrcp.pop %v1406
        %v1437 = vmul.f32 %v1365, %v1436
        %v1438 = vrcp.pop %v1413
        %v1439 = vmul.f32 %v1367, %v1438
        %v1440 = vrcp.pop %v1420
        %v1441 = vmul.f32 %v1369, %v1440
        %v1442 = vrcp.pop %v1427
        %v1443 = vmul.f32 %v1371, %v1442
        %1445 = vset.pattern.permute.xlu0 0
        %1446 = vperm.xlu0 %1445, %v1429
        %v1447 = vpop.permute.xlu0 %1446
        %1450 = vset.pattern.permute.xlu0 0
        %1451 = vperm.xlu0 %1450, %v1431
        %v1452 = vpop.permute.xlu0 %1451
        %1455 = vset.pattern.permute.xlu0 0
        %1456 = vperm.xlu0 %1455, %v1433
        %v1457 = vpop.permute.xlu0 %1456
        %1460 = vset.pattern.permute.xlu0 0
        %1461 = vperm.xlu0 %1460, %v1435
        %v1462 = vpop.permute.xlu0 %1461
        %1465 = vset.pattern.permute.xlu0 0
        %1466 = vperm.xlu0 %1465, %v1437
        %v1467 = vpop.permute.xlu0 %1466
        %1470 = vset.pattern.permute.xlu0 0
        %1471 = vperm.xlu0 %1470, %v1439
        %v1472 = vpop.permute.xlu0 %1471
        %1475 = vset.pattern.permute.xlu0 0
        %1476 = vperm.xlu0 %1475, %v1441
        %v1477 = vpop.permute.xlu0 %1476
        %1480 = vset.pattern.permute.xlu0 0
        %1481 = vperm.xlu0 %1480, %v1443
        %v1482 = vpop.permute.xlu0 %1481
        %v1484 = vmul.f32 %v314, %v1447
        %v1485 = vmul.f32 %v315, %v1452
        %v1486 = vmul.f32 %v316, %v1457
        %v1487 = vmul.f32 %v317, %v1462
        %v1488 = vmul.f32 %v318, %v1467
        %v1489 = vmul.f32 %v319, %v1472
        %v1490 = vmul.f32 %v320, %v1477
        %v1491 = vmul.f32 %v321, %v1482
        %v1492 = vsel %vm333, %v1484, 0.0
        %v1493 = vrot.slane %v1492, 4
        %v1494 = vadd.f32 %v1492, %v1493
        %v1495 = vrot.slane %v1494, 2
        %v1496 = vadd.f32 %v1494, %v1495
        %v1497 = vrot.slane %v1496, 1
        %v1498 = vadd.f32 %v1496, %v1497
        %v1499 = vsel %vm333, %v1485, 0.0
        %v1500 = vrot.slane %v1499, 4
        %v1501 = vadd.f32 %v1499, %v1500
        %v1502 = vrot.slane %v1501, 2
        %v1503 = vadd.f32 %v1501, %v1502
        %v1504 = vrot.slane %v1503, 1
        %v1505 = vadd.f32 %v1503, %v1504
        %v1506 = vsel %vm333, %v1486, 0.0
        %v1507 = vrot.slane %v1506, 4
        %v1508 = vadd.f32 %v1506, %v1507
        %v1509 = vrot.slane %v1508, 2
        %v1510 = vadd.f32 %v1508, %v1509
        %v1511 = vrot.slane %v1510, 1
        %v1512 = vadd.f32 %v1510, %v1511
        %v1513 = vsel %vm333, %v1487, 0.0
        %v1514 = vrot.slane %v1513, 4
        %v1515 = vadd.f32 %v1513, %v1514
        %v1516 = vrot.slane %v1515, 2
        %v1517 = vadd.f32 %v1515, %v1516
        %v1518 = vrot.slane %v1517, 1
        %v1519 = vadd.f32 %v1517, %v1518
        %v1520 = vsel %vm333, %v1488, 0.0
        %v1521 = vrot.slane %v1520, 4
        %v1522 = vadd.f32 %v1520, %v1521
        %v1523 = vrot.slane %v1522, 2
        %v1524 = vadd.f32 %v1522, %v1523
        %v1525 = vrot.slane %v1524, 1
        %v1526 = vadd.f32 %v1524, %v1525
        %v1527 = vsel %vm333, %v1489, 0.0
        %v1528 = vrot.slane %v1527, 4
        %v1529 = vadd.f32 %v1527, %v1528
        %v1530 = vrot.slane %v1529, 2
        %v1531 = vadd.f32 %v1529, %v1530
        %v1532 = vrot.slane %v1531, 1
        %v1533 = vadd.f32 %v1531, %v1532
        %v1534 = vsel %vm333, %v1490, 0.0
        %v1535 = vrot.slane %v1534, 4
        %v1536 = vadd.f32 %v1534, %v1535
        %v1537 = vrot.slane %v1536, 2
        %v1538 = vadd.f32 %v1536, %v1537
        %v1539 = vrot.slane %v1538, 1
        %v1540 = vadd.f32 %v1538, %v1539
        %v1541 = vsel %vm333, %v1491, 0.0
        %v1542 = vrot.slane %v1541, 4
        %v1543 = vadd.f32 %v1541, %v1542
        %v1544 = vrot.slane %v1543, 2
        %v1545 = vadd.f32 %v1543, %v1544
        %v1546 = vrot.slane %v1545, 1
        %v1547 = vadd.f32 %v1545, %v1546
        %vm1556 = vcmask 1041409
        %v1557 = vsel %vm1556, %v1505, %v1498
        %vm1558 = vcmask 1042434
        %v1559 = vsel %vm1558, %v1512, %v1557
        %vm1560 = vcmask 1043459
        %v1561 = vsel %vm1560, %v1519, %v1559
        %vm1562 = vcmask 1044484
        %v1563 = vsel %vm1562, %v1526, %v1561
        %vm1564 = vcmask 1045509
        %v1565 = vsel %vm1564, %v1533, %v1563
        %vm1566 = vcmask 1046534
        %v1567 = vsel %vm1566, %v1540, %v1565
        %vm1568 = vcmask 1047559
        %v1569 = vsel %vm1568, %v1547, %v1567
        %1571 = vst.msk [vmem:[%s298] sm:$0xff] %vm333, %v1569
        %v1572 = vlaneseq
        %v1573 = vand.u32 %v1572, 127
        %v1574 = vlaneseq
        %v1575 = vshrl.u32 %v1574, 7
        %v1576 = vsub.s32 %v1573, %v1575
        %v1577 = vrot.slane %v1447, %v1576
        %v1578 = vlaneseq
        %v1579 = vshrl.u32 %v1578, 7
        %v1580 = vsub.s32 %v1573, %v1579
        %v1581 = vrot.slane %v1452, %v1580
        %v1582 = vlaneseq
        %v1583 = vshrl.u32 %v1582, 7
        %v1584 = vsub.s32 %v1573, %v1583
        %v1585 = vrot.slane %v1457, %v1584
        %v1586 = vlaneseq
        %v1587 = vshrl.u32 %v1586, 7
        %v1588 = vsub.s32 %v1573, %v1587
        %v1589 = vrot.slane %v1462, %v1588
        %v1590 = vlaneseq
        %v1591 = vshrl.u32 %v1590, 7
        %v1592 = vsub.s32 %v1573, %v1591
        %v1593 = vrot.slane %v1467, %v1592
        %v1594 = vlaneseq
        %v1595 = vshrl.u32 %v1594, 7
        %v1596 = vsub.s32 %v1573, %v1595
        %v1597 = vrot.slane %v1472, %v1596
        %v1598 = vlaneseq
        %v1599 = vshrl.u32 %v1598, 7
        %v1600 = vsub.s32 %v1573, %v1599
        %v1601 = vrot.slane %v1477, %v1600
        %v1602 = vlaneseq
        %v1603 = vshrl.u32 %v1602, 7
        %v1604 = vsub.s32 %v1573, %v1603
        %v1605 = vrot.slane %v1482, %v1604
        %v1606 = vsel %vm1556, %v1581, %v1577
        %v1607 = vsel %vm1558, %v1585, %v1606
        %v1608 = vsel %vm1560, %v1589, %v1607
        %v1609 = vsel %vm1562, %v1593, %v1608
        %v1610 = vsel %vm1564, %v1597, %v1609
        %v1611 = vsel %vm1566, %v1601, %v1610
        %v1612 = vsel %vm1568, %v1605, %v1611
        %vm1614 = vcmask 64512
        %v1615 = vsel %vm1614, %v1612, 0.0
        %1616 = vst [vmem:[%s313] sm:$0xff] %v1615
        %s1617 = sand.u32 %s148, 1
        %s1618 = scalar_lea.sflag [#allocation4], %s1617
        %s1619 = sand.u32 %s148, 1
        %s1620 = smul.addr %s1619, 8
        %s1621 = scalar_lea.vmem [#allocation7], %s1620
        %p1622 = scmp.lt.s32.totalorder %s25, 1
        %s1623 = scalar_select %p1622, %s25, 1
        %s1624 = smul.addr %s1623, 8
        %s1625 = scalar_lea.vmem %s6, %s1624
        // Predicated region
        $region49: #{attention_pallas.1} parent=39 // pred_check
          %p1626 = pneg %p158
        $region50: #{attention_pallas.1} parent=39 // pred_check_branch
          %1628 = sbr.rel (%p1626) target = $region52
        $region51: #{attention_pallas.1} parent=39 // pred_region
          %s1630 = ssub.s32 128, 128
          %1631 = vsyncadd %s1618, %s1630
          %s1632 = smul.addr %s25, 128
          %s1633 = scalar_lea.hbm %s5, %s1632
          %s1635 = sshll.u32 %s1621, 4
          %s1636 = int_to_ptr.vmem [resolvable:$true] %s1635
          %1638 = dma.vmem_to_hbm [thread:$0]  %s1636, 128, %s1633, %s1618
        $region52: #{attention_pallas.1} parent=39 // pred_fallthru
          _
        // Predicated region
        $region53: #{attention_pallas.1} parent=39 // pred_check
          %p1639 = pneg %p184
        $region54: #{attention_pallas.1} parent=39 // pred_check_branch
          %1641 = sbr.rel (%p1639) target = $region56
        $region55: #{attention_pallas.1} parent=39 // pred_region
          _
        $region56: #{attention_pallas.1} parent=39 // pred_fallthru
          _
      $region40: #{attention_pallas.1} parent=5 // pred_fallthru
        _
      %p1642 = scmp.le.s32.totalorder 2, %s20
      // Predicated region
      $region57: #{attention_pallas.1} parent=5 // pred_check
        %p1643 = pneg %p1642
      $region58: #{attention_pallas.1} parent=5 // pred_check_branch
        %1645 = sbr.rel (%p1643) target = $region60
      $region59: #{attention_pallas.1} parent=5 // pred_region
        %s1646 = ssub.s32 %s20, 2
        // Predicated region
        $region61: #{attention_pallas.1} parent=59 // pred_check
          %p1647 = pneg %p164
        $region62: #{attention_pallas.1} parent=59 // pred_check_branch
          %1649 = sbr.rel (%p1647) target = $region64
        $region63: #{attention_pallas.1} parent=59 // pred_region
          %s1650 = sand.u32 %s149, 1
          %s1651 = scalar_lea.sflag [#allocation4], %s1650
          %s1652 = sand.u32 %s149, 1
          %s1653 = smul.addr %s1652, 8
          %s1654 = scalar_lea.vmem [#allocation7], %s1653
          %1655 = dma.done %s1651, 128
        $region64: #{attention_pallas.1} parent=59 // pred_fallthru
          _
        // Predicated region
        $region65: #{attention_pallas.1} parent=59 // pred_check
          %p1656 = pneg %p190
        $region66: #{attention_pallas.1} parent=59 // pred_check_branch
          %1658 = sbr.rel (%p1656) target = $region68
        $region67: #{attention_pallas.1} parent=59 // pred_region
          %p1659 = scmp.lt.s32.totalorder %s26, 1
          %s1660 = scalar_select %p1659, %s26, 1
          %s1661 = smul.addr %s1660, 8
          %s1662 = scalar_lea.vmem %s6, %s1661
        $region68: #{attention_pallas.1} parent=59 // pred_fallthru
          _
      $region60: #{attention_pallas.1} parent=5 // pred_fallthru
        _
    $region6: #{attention_pallas.1} parent=1 // loop_footer
      %s24 = sadd.s32 1, %s20
    $region7: #{attention_pallas.1} parent=1 // loop_footer_branch
      %19 = sbr.rel target = $region3
    $region8: #{attention_pallas.1} parent=1 // loop_exit
      _
    %1663 = vsyncpa [#allocation3], 1
    %s1664 = scalar_lea.sflag [#allocation3], 1
    %1665 = vsyncpa %s1664, 1
    %1666 = vsyncpa [#allocation6], 1
    %1667 = vsyncpa [#allocation4], 1
    %s1668 = scalar_lea.sflag [#allocation4], 1
    %1669 = vsyncpa %s1668, 1

</llo_original>
